<compile_context>
chip_gen: v6e
topology: v6e:2x2x1
jax: 0.10.0
libtpu: 0.0.40
codegen_flags: <defaults>
</compile_context>

<pallas_src>
import functools

import jax
import jax.numpy as jnp
from jax import lax
from jax.experimental import pallas as pl
from jax.experimental.pallas import tpu as pltpu


def _round_up(v, m):
    return ((v + m - 1) // m) * m


# Tap offsets (dh, dw).  Inner 3x3 window (shared by the 3x3 conv and the
# 3x3 maxpool) first, then the 16 outer taps only the 5x5 conv touches.
_INNER_TAPS = tuple((dh, dw) for dh in (-1, 0, 1) for dw in (-1, 0, 1))
_OUTER_TAPS = tuple((dh, dw) for dh in range(-2, 3) for dw in range(-2, 3)
                    if max(abs(dh), abs(dw)) == 2)


# ----------------------------- Pallas kernel -------------------------------


def _inception_kernel(x_ref, cmask_ref, pmask_ref, w1_ref, b1_ref, w35_ref,
                      b35_ref, wp_ref, bp_ref, o_ref,
                      rr_ref, col_ref, pool_ref,
                      *, W, hw_pad, c1, c1_s, crr_s, c5r_s, tail, c3, c5):
    """Whole Inception block for one batch element, (C, H*W) lane-dense layout.

    x_ref    : (1, cin_p, hw_pad)     input, channels / lanes zero-padded
    cmask_ref: (25, hw_pad)           per-tap in-bounds mask {1, 0}
    pmask_ref: (9, hw_pad)            per-tap pool mask {0, -inf}
    w1_ref   : (c1_s+crr_s, cin_p)    merged 1x1 weights [block1; block2_1; block3_1]
    b1_ref   : (c1_s+crr_s, 1)
    w35_ref  : (c3+c5, K)             stacked im2col weights for 3x3 + 5x5
    b35_ref  : (c3+c5, 1)
    wp_ref   : (cp, cin_p)            block4 1x1 weights
    bp_ref   : (cp, 1)
    o_ref    : (1, c1+c3+c5+cp, hw_pad)
    rr_ref   : (crr_s, hw_pad)        scratch: [r2; r3] reduce activations
    col_ref  : (K, hw_pad)            scratch: stacked im2col taps
    pool_ref : (cin_p, hw_pad)        scratch: 3x3 maxpool accumulator
    """
    x = x_ref[0]                                          # (cin_p, hw_pad)

    # ---- merged 1x1 convolutions (block1 + both reduce convs), bias folded ----
    y1 = jnp.dot(w1_ref[...], x, preferred_element_type=jnp.float32)
    y1 = y1 + b1_ref[...]
    o_ref[0, :c1, :] = y1[:c1].astype(o_ref.dtype)        # branch-1 output
    rr_ref[...] = y1[c1_s:].astype(rr_ref.dtype)          # [r2 ; r3] activations

    # ---- build the stacked im2col scratch + the 3x3 maxpool -------------------
    # Each tap: one XLU roll + one VPU mul (mask) + one lane-dense VMEM store.
    for i, (dh, dw) in enumerate(_INNER_TAPS):
        sh = (-(dh * W + dw)) % hw_pad
        m = cmask_ref[i:i + 1, :]                         # (1, hw_pad) {0,1}
        rr = rr_ref[...]
        rr = pltpu.roll(rr, sh, axis=1) if sh else rr
        col_ref[i * crr_s:(i + 1) * crr_s, :] = (rr * m).astype(col_ref.dtype)

        # 3x3 / stride-1 maxpool tap (implicit -inf padding via additive mask).
        xs = pltpu.roll(x, sh, axis=1) if sh else x
        cand = xs + pmask_ref[i:i + 1, :]
        if i == 0:
            pool_ref[...] = cand
        else:
            pool_ref[...] = jnp.maximum(pool_ref[...], cand)

    base = 9 * crr_s
    for j, (dh, dw) in enumerate(_OUTER_TAPS):            # 5x5-only taps
        sh = (-(dh * W + dw)) % hw_pad
        m = cmask_ref[9 + j:10 + j, :]
        rt = rr_ref[tail:, :]                             # 8-aligned r3 tail slice
        rt = pltpu.roll(rt, sh, axis=1) if sh else rt
        col_ref[base + j * c5r_s:base + (j + 1) * c5r_s, :] = (
            rt * m).astype(col_ref.dtype)

    # ---- fused 3x3 + 5x5 convolutions: one stacked-K MXU matmul --------------
    out35 = jnp.dot(w35_ref[...], col_ref[...],
                    preferred_element_type=jnp.float32)
    out35 = out35 + b35_ref[...]
    o_ref[0, c1:c1 + c3 + c5, :] = out35.astype(o_ref.dtype)

    # ---- pooled branch 1x1 conv ----------------------------------------------
    out4 = jnp.dot(wp_ref[...], pool_ref[...],
                   preferred_element_type=jnp.float32)
    out4 = out4 + bp_ref[...]
    o_ref[0, c1 + c3 + c5:, :] = out4.astype(o_ref.dtype)


# ----------------------------- weight repacking ------------------------------


def _prep_kernel_weights(params, cin, cin_p, compute_dtype):
    """Repack HWIO params into the kernel's merged / stacked-K layouts."""
    c1 = params["block1"][0].shape[-1]
    c3r = params["block2_1"][0].shape[-1]
    c3 = params["block2"][0].shape[-1]
    c5r = params["block3_1"][0].shape[-1]
    c5 = params["block3"][0].shape[-1]
    cp = params["block4"][0].shape[-1]

    crr = c3r + c5r
    c1_s = _round_up(c1, 8)            # 8-aligned start of rr inside y1
    crr_s = _round_up(crr, 8)          # padded rr rows (slot size of inner taps)
    tail = (c3r // 8) * 8              # 8-aligned start of the outer-tap slice
    c5r_s = crr_s - tail               # outer-tap slot size (contains all of r3)

    def w1x1(w):  # (1, 1, Cin, Cout) -> (Cout, Cin)
        return jnp.transpose(w[0, 0], (1, 0))

    # Merged 1x1 weights / biases (zero rows pad the 8-aligned splits,
    # zero columns null the channel padding of x).
    w1 = jnp.zeros((c1_s + crr_s, cin_p), jnp.float32)
    w1 = w1.at[:c1, :cin].set(w1x1(params["block1"][0]))
    w1 = w1.at[c1_s:c1_s + c3r, :cin].set(w1x1(params["block2_1"][0]))
    w1 = w1.at[c1_s + c3r:c1_s + crr, :cin].set(w1x1(params["block3_1"][0]))
    b1 = jnp.zeros((c1_s + crr_s, 1), jnp.float32)
    b1 = b1.at[:c1, 0].set(params["block1"][1])
    b1 = b1.at[c1_s:c1_s + c3r, 0].set(params["block2_1"][1])
    b1 = b1.at[c1_s + c3r:c1_s + crr, 0].set(params["block3_1"][1])

    # Stacked im2col weights: 9 inner slots of crr_s columns carry the
    # block-diagonal [3x3-tap | 5x5-tap], 16 outer slots of c5r_s columns
    # carry only the 5x5-tap weights (zero-block trimming).
    w2 = params["block2"][0]           # (3, 3, c3r, c3)
    w5 = params["block3"][0]           # (5, 5, c5r, c5)
    K = 9 * crr_s + 16 * c5r_s
    w35 = jnp.zeros((c3 + c5, K), jnp.float32)
    for i, (dh, dw) in enumerate(_INNER_TAPS):
        col0 = i * crr_s
        w35 = w35.at[:c3, col0:col0 + c3r].set(
            jnp.transpose(w2[dh + 1, dw + 1], (1, 0)))
        w35 = w35.at[c3:, col0 + c3r:col0 + crr].set(
            jnp.transpose(w5[dh + 2, dw + 2], (1, 0)))
    for j, (dh, dw) in enumerate(_OUTER_TAPS):
        col0 = 9 * crr_s + j * c5r_s + (c3r - tail)
        w35 = w35.at[c3:, col0:col0 + c5r].set(
            jnp.transpose(w5[dh + 2, dw + 2], (1, 0)))
    b35 = jnp.concatenate([params["block2"][1], params["block3"][1]],
                          axis=0)[:, None]

    wp = jnp.zeros((cp, cin_p), jnp.float32)
    wp = wp.at[:, :cin].set(w1x1(params["block4"][0]))
    bp = params["block4"][1][:, None]

    dims = dict(c1=c1, c1_s=c1_s, c3=c3, c5=c5, cp=cp,
                crr_s=crr_s, c5r_s=c5r_s, tail=tail, K=K)
    weights = (w1.astype(compute_dtype), b1,
               w35.astype(compute_dtype), b35,
               wp.astype(compute_dtype), bp)
    return weights, dims


# ----------------------------- Python wrapper -------------------------------


def inception_forward(params, x_nchw, *, compute_dtype=jnp.float32):
    """x_nchw: (N, Cin, H, W) -> (N, C1+C3+C5+Cp, H, W); matches torch.cat dim=1."""
    N, cin, H, W = x_nchw.shape
    HW = H * W
    cin_p = _round_up(cin, 8)          # pad channels to a full sublane group
    hw_pad = _round_up(HW, 128)        # lane-dense (unmasked vst) output width

    (w1, b1, w35, b35, wp, bp), d = _prep_kernel_weights(
        params, cin, cin_p, compute_dtype)
    c1, c1_s, c3, c5, cp = d["c1"], d["c1_s"], d["c3"], d["c5"], d["cp"]
    crr_s, c5r_s, tail, K = d["crr_s"], d["c5r_s"], d["tail"], d["K"]
    c_total = c1 + c3 + c5 + cp

    # NCHW -> (N, C, H*W) is a free reshape; pad channels + lanes with zeros.
    x = x_nchw.reshape(N, cin, HW).astype(compute_dtype)
    x = jnp.pad(x, ((0, 0), (0, cin_p - cin), (0, hw_pad - HW)))

    # Precompute the 25 per-tap in-bounds masks once on the host.
    hh = jnp.repeat(jnp.arange(H, dtype=jnp.int32), W)
    ww = jnp.tile(jnp.arange(W, dtype=jnp.int32), H)
    if hw_pad != HW:                   # padded lanes are never in-bounds
        pad_c = jnp.full((hw_pad - HW,), -10, jnp.int32)
        hh = jnp.concatenate([hh, pad_c])
        ww = jnp.concatenate([ww, pad_c])
    taps = _INNER_TAPS + _OUTER_TAPS
    inb = jnp.stack([(hh + dh >= 0) & (hh + dh < H) &
                     (ww + dw >= 0) & (ww + dw < W) for (dh, dw) in taps])
    cmask = inb.astype(compute_dtype)                      # (25, hw_pad) {1,0}
    pmask = jnp.where(inb[:9], 0.0, -jnp.inf).astype(compute_dtype)  # (9, hw_pad)

    kernel = functools.partial(
        _inception_kernel, W=W, hw_pad=hw_pad, c1=c1, c1_s=c1_s,
        crr_s=crr_s, c5r_s=c5r_s, tail=tail, c3=c3, c5=c5)

    out = pl.pallas_call(
        kernel,
        out_shape=jax.ShapeDtypeStruct((N, c_total, hw_pad), x_nchw.dtype),
        grid=(N,),
        in_specs=[
            pl.BlockSpec((1, cin_p, hw_pad), lambda n: (n, 0, 0)),
            pl.BlockSpec((25, hw_pad), lambda n: (0, 0)),
            pl.BlockSpec((9, hw_pad), lambda n: (0, 0)),
            pl.BlockSpec(w1.shape, lambda n: (0, 0)),
            pl.BlockSpec(b1.shape, lambda n: (0, 0)),
            pl.BlockSpec(w35.shape, lambda n: (0, 0)),
            pl.BlockSpec(b35.shape, lambda n: (0, 0)),
            pl.BlockSpec(wp.shape, lambda n: (0, 0)),
            pl.BlockSpec(bp.shape, lambda n: (0, 0)),
        ],
        out_specs=pl.BlockSpec((1, c_total, hw_pad), lambda n: (n, 0, 0)),
        scratch_shapes=[
            pltpu.VMEM((crr_s, hw_pad), compute_dtype),    # rr
            pltpu.VMEM((K, hw_pad), compute_dtype),        # stacked im2col
            pltpu.VMEM((cin_p, hw_pad), compute_dtype),    # maxpool accumulator
        ],
        compiler_params=pltpu.CompilerParams(
            dimension_semantics=("parallel",)),
    )(x, cmask, pmask, w1, b1, w35, b35, wp, bp)

    out = out[..., :HW]                # crop lane padding
    return out.reshape(N, c_total, H, W)


# ----------------------------- parameter init -------------------------------


def init_inception_params(key, in_channels, out_1, out_3_reduce, out_3,
                          out_5_reduce, out_5, out_pool):
    """Deterministic synthetic parameters. Weights stored as (KH, KW, Cin, Cout)."""
    def conv_init(k, kh, kw, cin, cout):
        kw_key, kb_key = jax.random.split(k)
        scale = 1.0 / jnp.sqrt(jnp.float32(cin * kh * kw))
        w = jax.random.normal(kw_key, (kh, kw, cin, cout), jnp.float32) * scale
        b = jax.random.normal(kb_key, (cout,), jnp.float32) * scale
        return w, b

    keys = jax.random.split(key, 6)
    return {
        "block1":   conv_init(keys[0], 1, 1, in_channels, out_1),
        "block2_1": conv_init(keys[1], 1, 1, in_channels, out_3_reduce),
        "block2":   conv_init(keys[2], 3, 3, out_3_reduce, out_3),
        "block3_1": conv_init(keys[3], 1, 1, in_channels, out_5_reduce),
        "block3":   conv_init(keys[4], 5, 5, out_5_reduce, out_5),
        "block4":   conv_init(keys[5], 1, 1, in_channels, out_pool),
    }


# ------------------------- reference (plain JAX) -----------------------------


def _ref_conv(x, w, b, padding):
    y = lax.conv_general_dilated(
        x, w, window_strides=(1, 1),
        padding=((padding, padding), (padding, padding)),
        dimension_numbers=("NHWC", "HWIO", "NHWC"),
        precision=lax.Precision.HIGHEST)
    return y + b[None, None, None, :]


def inception_forward_ref(params, x_nchw):
    x = jnp.transpose(x_nchw, (0, 2, 3, 1))
    out1 = _ref_conv(x, *params["block1"], 0)
    out2 = _ref_conv(_ref_conv(x, *params["block2_1"], 0), *params["block2"], 1)
    out3 = _ref_conv(_ref_conv(x, *params["block3_1"], 0), *params["block3"], 2)
    xp = jnp.pad(x, ((0, 0), (1, 1), (1, 1), (0, 0)), constant_values=-jnp.inf)
    p4 = lax.reduce_window(xp, -jnp.inf, lax.max,
                           (1, 3, 3, 1), (1, 1, 1, 1), "VALID")
    out4 = _ref_conv(p4, *params["block4"], 0)
    out = jnp.concatenate([out1, out2, out3, out4], axis=-1)
    return jnp.transpose(out, (0, 3, 1, 2))


# ---------------------------------- main -------------------------------------


if __name__ == "__main__":
    key = jax.random.PRNGKey(0)
    pkey, xkey = jax.random.split(key)

    # Inception(in_channels=4, out_1=8, out_3_reduce=4, out_3=8,
    #           out_5_reduce=4, out_5=8, out_pool=4)
    in_channels, out_1, out_3_r, out_3, out_5_r, out_5, out_pool = 4, 8, 4, 8, 4, 8, 4
    params = init_inception_params(pkey, in_channels, out_1, out_3_r, out_3,
                                   out_5_r, out_5, out_pool)

    N, H, W = 2, 16, 16
    x = jax.random.normal(xkey, (N, in_channels, H, W), jnp.float32)

    fwd = jax.jit(inception_forward)
    out = jax.block_until_ready(fwd(params, x))

    expected_c = out_1 + out_3 + out_5 + out_pool
    assert out.shape == (N, expected_c, H, W), out.shape

    ref = jax.block_until_ready(inception_forward_ref(params, x))
    assert jnp.allclose(out, ref, atol=1e-4, rtol=1e-4), float(
        jnp.max(jnp.abs(out - ref)))

    print("KERNEL_OK")
</pallas_src>

<mosaic_0001>
module attributes {stable_mosaic.version = 11 : i64} {
  func.func @_inception_kernel(%arg0: i32, %arg1: memref<1x8x256xf32, #tpu.memory_space<vmem>>, %arg2: memref<25x256xf32, #tpu.memory_space<vmem>>, %arg3: memref<9x256xf32, #tpu.memory_space<vmem>>, %arg4: memref<16x8xf32, #tpu.memory_space<vmem>>, %arg5: memref<16x1xf32, #tpu.memory_space<vmem>>, %arg6: memref<16x200xf32, #tpu.memory_space<vmem>>, %arg7: memref<16x1xf32, #tpu.memory_space<vmem>>, %arg8: memref<4x8xf32, #tpu.memory_space<vmem>>, %arg9: memref<4x1xf32, #tpu.memory_space<vmem>>, %arg10: memref<1x28x256xf32, #tpu.memory_space<vmem>>, %arg11: memref<8x256xf32, #tpu.memory_space<vmem>>, %arg12: memref<200x256xf32, #tpu.memory_space<vmem>>, %arg13: memref<8x256xf32, #tpu.memory_space<vmem>>) attributes {dimension_semantics = [#tpu.dimension_semantics<parallel>], iteration_bounds = array<i64: 2>, scalar_prefetch = 0 : i64, scratch_operands = 3 : i64, tpu.core_type = #tpu.core_type<tc>, window_params = [{transform_indices = @transform_0, window_bounds = array<i64: 1, 8, 256>}, {pipeline_mode = #tpu.pipeline_mode<synchronous>, transform_indices = @transform_1, window_bounds = array<i64: 25, 256>}, {pipeline_mode = #tpu.pipeline_mode<synchronous>, transform_indices = @transform_2, window_bounds = array<i64: 9, 256>}, {pipeline_mode = #tpu.pipeline_mode<synchronous>, transform_indices = @transform_3, window_bounds = array<i64: 16, 8>}, {pipeline_mode = #tpu.pipeline_mode<synchronous>, transform_indices = @transform_4, window_bounds = array<i64: 16, 1>}, {pipeline_mode = #tpu.pipeline_mode<synchronous>, transform_indices = @transform_5, window_bounds = array<i64: 16, 200>}, {pipeline_mode = #tpu.pipeline_mode<synchronous>, transform_indices = @transform_6, window_bounds = array<i64: 16, 1>}, {pipeline_mode = #tpu.pipeline_mode<synchronous>, transform_indices = @transform_7, window_bounds = array<i64: 4, 8>}, {pipeline_mode = #tpu.pipeline_mode<synchronous>, transform_indices = @transform_8, window_bounds = array<i64: 4, 1>}, {transform_indices = @transform_9, window_bounds = array<i64: 1, 28, 256>}]} {
    %c0 = arith.constant 0 : index
    %c0_0 = arith.constant 0 : index
    %c0_1 = arith.constant 0 : index
    %0 = vector.load %arg1[%c0, %c0_0, %c0_1] : memref<1x8x256xf32, #tpu.memory_space<vmem>>, vector<1x8x256xf32>
    %1 = vector.shape_cast %0 : vector<1x8x256xf32> to vector<8x256xf32>
    %c0_2 = arith.constant 0 : index
    %c0_3 = arith.constant 0 : index
    %2 = vector.load %arg4[%c0_2, %c0_3] : memref<16x8xf32, #tpu.memory_space<vmem>>, vector<16x8xf32>
    %cst = arith.constant dense<0.000000e+00> : vector<16x256xf32>
    %3 = tpu.matmul %2, %1, %cst {dimension_numbers = #tpu.dot_dimension_numbers<[1], [0], [0], [1], [0, 0, 1, 1], [], []>} : vector<16x8xf32>, vector<8x256xf32>, vector<16x256xf32> -> vector<16x256xf32>
    %c0_4 = arith.constant 0 : index
    %c0_5 = arith.constant 0 : index
    %4 = vector.load %arg5[%c0_4, %c0_5] : memref<16x1xf32, #tpu.memory_space<vmem>>, vector<16x1xf32>
    %5 = vector.broadcast %4 : vector<16x1xf32> to vector<16x256xf32>
    %6 = arith.addf %3, %5 : vector<16x256xf32>
    %7 = vector.extract_strided_slice %6 {offsets = [0, 0], sizes = [8, 256], strides = [1, 1]} : vector<16x256xf32> to vector<8x256xf32>
    %c0_6 = arith.constant 0 : index
    %c0_7 = arith.constant 0 : index
    %c0_8 = arith.constant 0 : index
    %8 = vector.load %arg10[%c0_6, %c0_7, %c0_8] : memref<1x28x256xf32, #tpu.memory_space<vmem>>, vector<1x8x256xf32>
    %9 = vector.shape_cast %8 : vector<1x8x256xf32> to vector<8x256xf32>
    %10 = vector.shape_cast %7 : vector<8x256xf32> to vector<1x8x256xf32>
    tpu.vector_store %arg10[%c0_6, %c0_7, %c0_8], %10 {strides = array<i32>} : memref<1x28x256xf32, #tpu.memory_space<vmem>>, vector<1x8x256xf32>,
    %11 = vector.extract_strided_slice %6 {offsets = [8, 0], sizes = [8, 256], strides = [1, 1]} : vector<16x256xf32> to vector<8x256xf32>
    %c0_9 = arith.constant 0 : index
    %c0_10 = arith.constant 0 : index
    %12 = vector.load %arg11[%c0_9, %c0_10] : memref<8x256xf32, #tpu.memory_space<vmem>>, vector<8x256xf32>
    tpu.vector_store %arg11[%c0_9, %c0_10], %11 {strides = array<i32>} : memref<8x256xf32, #tpu.memory_space<vmem>>, vector<8x256xf32>,
    %c0_11 = arith.constant 0 : index
    %c0_12 = arith.constant 0 : index
    %13 = vector.load %arg2[%c0_11, %c0_12] : memref<25x256xf32, #tpu.memory_space<vmem>>, vector<1x256xf32>
    %c0_13 = arith.constant 0 : index
    %c0_14 = arith.constant 0 : index
    %14 = vector.load %arg11[%c0_13, %c0_14] : memref<8x256xf32, #tpu.memory_space<vmem>>, vector<8x256xf32>
    %c17_i32 = arith.constant 17 : i32
    %15 = tpu.dynamic_rotate %14 by %c17_i32 dim 1 : vector<8x256xf32>, i32 -> vector<8x256xf32>
    %16 = vector.broadcast %13 : vector<1x256xf32> to vector<8x256xf32>
    %17 = arith.mulf %15, %16 : vector<8x256xf32>
    %c0_15 = arith.constant 0 : index
    %c0_16 = arith.constant 0 : index
    %18 = vector.load %arg12[%c0_15, %c0_16] : memref<200x256xf32, #tpu.memory_space<vmem>>, vector<8x256xf32>
    tpu.vector_store %arg12[%c0_15, %c0_16], %17 {strides = array<i32>} : memref<200x256xf32, #tpu.memory_space<vmem>>, vector<8x256xf32>,
    %c17_i32_17 = arith.constant 17 : i32
    %19 = tpu.dynamic_rotate %1 by %c17_i32_17 dim 1 : vector<8x256xf32>, i32 -> vector<8x256xf32>
    %c0_18 = arith.constant 0 : index
    %c0_19 = arith.constant 0 : index
    %20 = vector.load %arg3[%c0_18, %c0_19] : memref<9x256xf32, #tpu.memory_space<vmem>>, vector<1x256xf32>
    %21 = vector.broadcast %20 : vector<1x256xf32> to vector<8x256xf32>
    %22 = arith.addf %19, %21 : vector<8x256xf32>
    %c0_20 = arith.constant 0 : index
    %c0_21 = arith.constant 0 : index
    %23 = vector.load %arg13[%c0_20, %c0_21] : memref<8x256xf32, #tpu.memory_space<vmem>>, vector<8x256xf32>
    tpu.vector_store %arg13[%c0_20, %c0_21], %22 {strides = array<i32>} : memref<8x256xf32, #tpu.memory_space<vmem>>, vector<8x256xf32>,
    %c1 = arith.constant 1 : index
    %c0_22 = arith.constant 0 : index
    %24 = vector.load %arg2[%c1, %c0_22] : memref<25x256xf32, #tpu.memory_space<vmem>>, vector<1x256xf32>
    %c0_23 = arith.constant 0 : index
    %c0_24 = arith.constant 0 : index
    %25 = vector.load %arg11[%c0_23, %c0_24] : memref<8x256xf32, #tpu.memory_space<vmem>>, vector<8x256xf32>
    %c16_i32 = arith.constant 16 : i32
    %26 = tpu.dynamic_rotate %25 by %c16_i32 dim 1 : vector<8x256xf32>, i32 -> vector<8x256xf32>
    %27 = vector.broadcast %24 : vector<1x256xf32> to vector<8x256xf32>
    %28 = arith.mulf %26, %27 : vector<8x256xf32>
    %c8 = arith.constant 8 : index
    %c0_25 = arith.constant 0 : index
    %29 = vector.load %arg12[%c8, %c0_25] : memref<200x256xf32, #tpu.memory_space<vmem>>, vector<8x256xf32>
    tpu.vector_store %arg12[%c8, %c0_25], %28 {strides = array<i32>} : memref<200x256xf32, #tpu.memory_space<vmem>>, vector<8x256xf32>,
    %c16_i32_26 = arith.constant 16 : i32
    %30 = tpu.dynamic_rotate %1 by %c16_i32_26 dim 1 : vector<8x256xf32>, i32 -> vector<8x256xf32>
    %c1_27 = arith.constant 1 : index
    %c0_28 = arith.constant 0 : index
    %31 = vector.load %arg3[%c1_27, %c0_28] : memref<9x256xf32, #tpu.memory_space<vmem>>, vector<1x256xf32>
    %32 = vector.broadcast %31 : vector<1x256xf32> to vector<8x256xf32>
    %33 = arith.addf %30, %32 : vector<8x256xf32>
    %c0_29 = arith.constant 0 : index
    %c0_30 = arith.constant 0 : index
    %34 = vector.load %arg13[%c0_29, %c0_30] : memref<8x256xf32, #tpu.memory_space<vmem>>, vector<8x256xf32>
    %35 = arith.maximumf %34, %33 : vector<8x256xf32>
    %c0_31 = arith.constant 0 : index
    %c0_32 = arith.constant 0 : index
    %36 = vector.load %arg13[%c0_31, %c0_32] : memref<8x256xf32, #tpu.memory_space<vmem>>, vector<8x256xf32>
    tpu.vector_store %arg13[%c0_31, %c0_32], %35 {strides = array<i32>} : memref<8x256xf32, #tpu.memory_space<vmem>>, vector<8x256xf32>,
    %c2 = arith.constant 2 : index
    %c0_33 = arith.constant 0 : index
    %37 = vector.load %arg2[%c2, %c0_33] : memref<25x256xf32, #tpu.memory_space<vmem>>, vector<1x256xf32>
    %c0_34 = arith.constant 0 : index
    %c0_35 = arith.constant 0 : index
    %38 = vector.load %arg11[%c0_34, %c0_35] : memref<8x256xf32, #tpu.memory_space<vmem>>, vector<8x256xf32>
    %c15_i32 = arith.constant 15 : i32
    %39 = tpu.dynamic_rotate %38 by %c15_i32 dim 1 : vector<8x256xf32>, i32 -> vector<8x256xf32>
    %40 = vector.broadcast %37 : vector<1x256xf32> to vector<8x256xf32>
    %41 = arith.mulf %39, %40 : vector<8x256xf32>
    %c16 = arith.constant 16 : index
    %c0_36 = arith.constant 0 : index
    %42 = vector.load %arg12[%c16, %c0_36] : memref<200x256xf32, #tpu.memory_space<vmem>>, vector<8x256xf32>
    tpu.vector_store %arg12[%c16, %c0_36], %41 {strides = array<i32>} : memref<200x256xf32, #tpu.memory_space<vmem>>, vector<8x256xf32>,
    %c15_i32_37 = arith.constant 15 : i32
    %43 = tpu.dynamic_rotate %1 by %c15_i32_37 dim 1 : vector<8x256xf32>, i32 -> vector<8x256xf32>
    %c2_38 = arith.constant 2 : index
    %c0_39 = arith.constant 0 : index
    %44 = vector.load %arg3[%c2_38, %c0_39] : memref<9x256xf32, #tpu.memory_space<vmem>>, vector<1x256xf32>
    %45 = vector.broadcast %44 : vector<1x256xf32> to vector<8x256xf32>
    %46 = arith.addf %43, %45 : vector<8x256xf32>
    %c0_40 = arith.constant 0 : index
    %c0_41 = arith.constant 0 : index
    %47 = vector.load %arg13[%c0_40, %c0_41] : memref<8x256xf32, #tpu.memory_space<vmem>>, vector<8x256xf32>
    %48 = arith.maximumf %47, %46 : vector<8x256xf32>
    %c0_42 = arith.constant 0 : index
    %c0_43 = arith.constant 0 : index
    %49 = vector.load %arg13[%c0_42, %c0_43] : memref<8x256xf32, #tpu.memory_space<vmem>>, vector<8x256xf32>
    tpu.vector_store %arg13[%c0_42, %c0_43], %48 {strides = array<i32>} : memref<8x256xf32, #tpu.memory_space<vmem>>, vector<8x256xf32>,
    %c3 = arith.constant 3 : index
    %c0_44 = arith.constant 0 : index
    %50 = vector.load %arg2[%c3, %c0_44] : memref<25x256xf32, #tpu.memory_space<vmem>>, vector<1x256xf32>
    %c0_45 = arith.constant 0 : index
    %c0_46 = arith.constant 0 : index
    %51 = vector.load %arg11[%c0_45, %c0_46] : memref<8x256xf32, #tpu.memory_space<vmem>>, vector<8x256xf32>
    %c1_i32 = arith.constant 1 : i32
    %52 = tpu.dynamic_rotate %51 by %c1_i32 dim 1 : vector<8x256xf32>, i32 -> vector<8x256xf32>
    %53 = vector.broadcast %50 : vector<1x256xf32> to vector<8x256xf32>
    %54 = arith.mulf %52, %53 : vector<8x256xf32>
    %c24 = arith.constant 24 : index
    %c0_47 = arith.constant 0 : index
    %55 = vector.load %arg12[%c24, %c0_47] : memref<200x256xf32, #tpu.memory_space<vmem>>, vector<8x256xf32>
    tpu.vector_store %arg12[%c24, %c0_47], %54 {strides = array<i32>} : memref<200x256xf32, #tpu.memory_space<vmem>>, vector<8x256xf32>,
    %c1_i32_48 = arith.constant 1 : i32
    %56 = tpu.dynamic_rotate %1 by %c1_i32_48 dim 1 : vector<8x256xf32>, i32 -> vector<8x256xf32>
    %c3_49 = arith.constant 3 : index
    %c0_50 = arith.constant 0 : index
    %57 = vector.load %arg3[%c3_49, %c0_50] : memref<9x256xf32, #tpu.memory_space<vmem>>, vector<1x256xf32>
    %58 = vector.broadcast %57 : vector<1x256xf32> to vector<8x256xf32>
    %59 = arith.addf %56, %58 : vector<8x256xf32>
    %c0_51 = arith.constant 0 : index
    %c0_52 = arith.constant 0 : index
    %60 = vector.load %arg13[%c0_51, %c0_52] : memref<8x256xf32, #tpu.memory_space<vmem>>, vector<8x256xf32>
    %61 = arith.maximumf %60, %59 : vector<8x256xf32>
    %c0_53 = arith.constant 0 : index
    %c0_54 = arith.constant 0 : index
    %62 = vector.load %arg13[%c0_53, %c0_54] : memref<8x256xf32, #tpu.memory_space<vmem>>, vector<8x256xf32>
    tpu.vector_store %arg13[%c0_53, %c0_54], %61 {strides = array<i32>} : memref<8x256xf32, #tpu.memory_space<vmem>>, vector<8x256xf32>,
    %c4 = arith.constant 4 : index
    %c0_55 = arith.constant 0 : index
    %63 = vector.load %arg2[%c4, %c0_55] : memref<25x256xf32, #tpu.memory_space<vmem>>, vector<1x256xf32>
    %c0_56 = arith.constant 0 : index
    %c0_57 = arith.constant 0 : index
    %64 = vector.load %arg11[%c0_56, %c0_57] : memref<8x256xf32, #tpu.memory_space<vmem>>, vector<8x256xf32>
    %65 = vector.broadcast %63 : vector<1x256xf32> to vector<8x256xf32>
    %66 = arith.mulf %64, %65 : vector<8x256xf32>
    %c32 = arith.constant 32 : index
    %c0_58 = arith.constant 0 : index
    %67 = vector.load %arg12[%c32, %c0_58] : memref<200x256xf32, #tpu.memory_space<vmem>>, vector<8x256xf32>
    tpu.vector_store %arg12[%c32, %c0_58], %66 {strides = array<i32>} : memref<200x256xf32, #tpu.memory_space<vmem>>, vector<8x256xf32>,
    %c4_59 = arith.constant 4 : index
    %c0_60 = arith.constant 0 : index
    %68 = vector.load %arg3[%c4_59, %c0_60] : memref<9x256xf32, #tpu.memory_space<vmem>>, vector<1x256xf32>
    %69 = vector.broadcast %68 : vector<1x256xf32> to vector<8x256xf32>
    %70 = arith.addf %1, %69 : vector<8x256xf32>
    %c0_61 = arith.constant 0 : index
    %c0_62 = arith.constant 0 : index
    %71 = vector.load %arg13[%c0_61, %c0_62] : memref<8x256xf32, #tpu.memory_space<vmem>>, vector<8x256xf32>
    %72 = arith.maximumf %71, %70 : vector<8x256xf32>
    %c0_63 = arith.constant 0 : index
    %c0_64 = arith.constant 0 : index
    %73 = vector.load %arg13[%c0_63, %c0_64] : memref<8x256xf32, #tpu.memory_space<vmem>>, vector<8x256xf32>
    tpu.vector_store %arg13[%c0_63, %c0_64], %72 {strides = array<i32>} : memref<8x256xf32, #tpu.memory_space<vmem>>, vector<8x256xf32>,
    %c5 = arith.constant 5 : index
    %c0_65 = arith.constant 0 : index
    %74 = vector.load %arg2[%c5, %c0_65] : memref<25x256xf32, #tpu.memory_space<vmem>>, vector<1x256xf32>
    %c0_66 = arith.constant 0 : index
    %c0_67 = arith.constant 0 : index
    %75 = vector.load %arg11[%c0_66, %c0_67] : memref<8x256xf32, #tpu.memory_space<vmem>>, vector<8x256xf32>
    %c255_i32 = arith.constant 255 : i32
    %76 = tpu.dynamic_rotate %75 by %c255_i32 dim 1 : vector<8x256xf32>, i32 -> vector<8x256xf32>
    %77 = vector.broadcast %74 : vector<1x256xf32> to vector<8x256xf32>
    %78 = arith.mulf %76, %77 : vector<8x256xf32>
    %c40 = arith.constant 40 : index
    %c0_68 = arith.constant 0 : index
    %79 = vector.load %arg12[%c40, %c0_68] : memref<200x256xf32, #tpu.memory_space<vmem>>, vector<8x256xf32>
    tpu.vector_store %arg12[%c40, %c0_68], %78 {strides = array<i32>} : memref<200x256xf32, #tpu.memory_space<vmem>>, vector<8x256xf32>,
    %c255_i32_69 = arith.constant 255 : i32
    %80 = tpu.dynamic_rotate %1 by %c255_i32_69 dim 1 : vector<8x256xf32>, i32 -> vector<8x256xf32>
    %c5_70 = arith.constant 5 : index
    %c0_71 = arith.constant 0 : index
    %81 = vector.load %arg3[%c5_70, %c0_71] : memref<9x256xf32, #tpu.memory_space<vmem>>, vector<1x256xf32>
    %82 = vector.broadcast %81 : vector<1x256xf32> to vector<8x256xf32>
    %83 = arith.addf %80, %82 : vector<8x256xf32>
    %c0_72 = arith.constant 0 : index
    %c0_73 = arith.constant 0 : index
    %84 = vector.load %arg13[%c0_72, %c0_73] : memref<8x256xf32, #tpu.memory_space<vmem>>, vector<8x256xf32>
    %85 = arith.maximumf %84, %83 : vector<8x256xf32>
    %c0_74 = arith.constant 0 : index
    %c0_75 = arith.constant 0 : index
    %86 = vector.load %arg13[%c0_74, %c0_75] : memref<8x256xf32, #tpu.memory_space<vmem>>, vector<8x256xf32>
    tpu.vector_store %arg13[%c0_74, %c0_75], %85 {strides = array<i32>} : memref<8x256xf32, #tpu.memory_space<vmem>>, vector<8x256xf32>,
    %c6 = arith.constant 6 : index
    %c0_76 = arith.constant 0 : index
    %87 = vector.load %arg2[%c6, %c0_76] : memref<25x256xf32, #tpu.memory_space<vmem>>, vector<1x256xf32>
    %c0_77 = arith.constant 0 : index
    %c0_78 = arith.constant 0 : index
    %88 = vector.load %arg11[%c0_77, %c0_78] : memref<8x256xf32, #tpu.memory_space<vmem>>, vector<8x256xf32>
    %c241_i32 = arith.constant 241 : i32
    %89 = tpu.dynamic_rotate %88 by %c241_i32 dim 1 : vector<8x256xf32>, i32 -> vector<8x256xf32>
    %90 = vector.broadcast %87 : vector<1x256xf32> to vector<8x256xf32>
    %91 = arith.mulf %89, %90 : vector<8x256xf32>
    %c48 = arith.constant 48 : index
    %c0_79 = arith.constant 0 : index
    %92 = vector.load %arg12[%c48, %c0_79] : memref<200x256xf32, #tpu.memory_space<vmem>>, vector<8x256xf32>
    tpu.vector_store %arg12[%c48, %c0_79], %91 {strides = array<i32>} : memref<200x256xf32, #tpu.memory_space<vmem>>, vector<8x256xf32>,
    %c241_i32_80 = arith.constant 241 : i32
    %93 = tpu.dynamic_rotate %1 by %c241_i32_80 dim 1 : vector<8x256xf32>, i32 -> vector<8x256xf32>
    %c6_81 = arith.constant 6 : index
    %c0_82 = arith.constant 0 : index
    %94 = vector.load %arg3[%c6_81, %c0_82] : memref<9x256xf32, #tpu.memory_space<vmem>>, vector<1x256xf32>
    %95 = vector.broadcast %94 : vector<1x256xf32> to vector<8x256xf32>
    %96 = arith.addf %93, %95 : vector<8x256xf32>
    %c0_83 = arith.constant 0 : index
    %c0_84 = arith.constant 0 : index
    %97 = vector.load %arg13[%c0_83, %c0_84] : memref<8x256xf32, #tpu.memory_space<vmem>>, vector<8x256xf32>
    %98 = arith.maximumf %97, %96 : vector<8x256xf32>
    %c0_85 = arith.constant 0 : index
    %c0_86 = arith.constant 0 : index
    %99 = vector.load %arg13[%c0_85, %c0_86] : memref<8x256xf32, #tpu.memory_space<vmem>>, vector<8x256xf32>
    tpu.vector_store %arg13[%c0_85, %c0_86], %98 {strides = array<i32>} : memref<8x256xf32, #tpu.memory_space<vmem>>, vector<8x256xf32>,
    %c7 = arith.constant 7 : index
    %c0_87 = arith.constant 0 : index
    %100 = vector.load %arg2[%c7, %c0_87] : memref<25x256xf32, #tpu.memory_space<vmem>>, vector<1x256xf32>
    %c0_88 = arith.constant 0 : index
    %c0_89 = arith.constant 0 : index
    %101 = vector.load %arg11[%c0_88, %c0_89] : memref<8x256xf32, #tpu.memory_space<vmem>>, vector<8x256xf32>
    %c240_i32 = arith.constant 240 : i32
    %102 = tpu.dynamic_rotate %101 by %c240_i32 dim 1 : vector<8x256xf32>, i32 -> vector<8x256xf32>
    %103 = vector.broadcast %100 : vector<1x256xf32> to vector<8x256xf32>
    %104 = arith.mulf %102, %103 : vector<8x256xf32>
    %c56 = arith.constant 56 : index
    %c0_90 = arith.constant 0 : index
    %105 = vector.load %arg12[%c56, %c0_90] : memref<200x256xf32, #tpu.memory_space<vmem>>, vector<8x256xf32>
    tpu.vector_store %arg12[%c56, %c0_90], %104 {strides = array<i32>} : memref<200x256xf32, #tpu.memory_space<vmem>>, vector<8x256xf32>,
    %c240_i32_91 = arith.constant 240 : i32
    %106 = tpu.dynamic_rotate %1 by %c240_i32_91 dim 1 : vector<8x256xf32>, i32 -> vector<8x256xf32>
    %c7_92 = arith.constant 7 : index
    %c0_93 = arith.constant 0 : index
    %107 = vector.load %arg3[%c7_92, %c0_93] : memref<9x256xf32, #tpu.memory_space<vmem>>, vector<1x256xf32>
    %108 = vector.broadcast %107 : vector<1x256xf32> to vector<8x256xf32>
    %109 = arith.addf %106, %108 : vector<8x256xf32>
    %c0_94 = arith.constant 0 : index
    %c0_95 = arith.constant 0 : index
    %110 = vector.load %arg13[%c0_94, %c0_95] : memref<8x256xf32, #tpu.memory_space<vmem>>, vector<8x256xf32>
    %111 = arith.maximumf %110, %109 : vector<8x256xf32>
    %c0_96 = arith.constant 0 : index
    %c0_97 = arith.constant 0 : index
    %112 = vector.load %arg13[%c0_96, %c0_97] : memref<8x256xf32, #tpu.memory_space<vmem>>, vector<8x256xf32>
    tpu.vector_store %arg13[%c0_96, %c0_97], %111 {strides = array<i32>} : memref<8x256xf32, #tpu.memory_space<vmem>>, vector<8x256xf32>,
    %c8_98 = arith.constant 8 : index
    %c0_99 = arith.constant 0 : index
    %113 = vector.load %arg2[%c8_98, %c0_99] : memref<25x256xf32, #tpu.memory_space<vmem>>, vector<1x256xf32>
    %c0_100 = arith.constant 0 : index
    %c0_101 = arith.constant 0 : index
    %114 = vector.load %arg11[%c0_100, %c0_101] : memref<8x256xf32, #tpu.memory_space<vmem>>, vector<8x256xf32>
    %c239_i32 = arith.constant 239 : i32
    %115 = tpu.dynamic_rotate %114 by %c239_i32 dim 1 : vector<8x256xf32>, i32 -> vector<8x256xf32>
    %116 = vector.broadcast %113 : vector<1x256xf32> to vector<8x256xf32>
    %117 = arith.mulf %115, %116 : vector<8x256xf32>
    %c64 = arith.constant 64 : index
    %c0_102 = arith.constant 0 : index
    %118 = vector.load %arg12[%c64, %c0_102] : memref<200x256xf32, #tpu.memory_space<vmem>>, vector<8x256xf32>
    tpu.vector_store %arg12[%c64, %c0_102], %117 {strides = array<i32>} : memref<200x256xf32, #tpu.memory_space<vmem>>, vector<8x256xf32>,
    %c239_i32_103 = arith.constant 239 : i32
    %119 = tpu.dynamic_rotate %1 by %c239_i32_103 dim 1 : vector<8x256xf32>, i32 -> vector<8x256xf32>
    %c8_104 = arith.constant 8 : index
    %c0_105 = arith.constant 0 : index
    %120 = vector.load %arg3[%c8_104, %c0_105] : memref<9x256xf32, #tpu.memory_space<vmem>>, vector<1x256xf32>
    %121 = vector.broadcast %120 : vector<1x256xf32> to vector<8x256xf32>
    %122 = arith.addf %119, %121 : vector<8x256xf32>
    %c0_106 = arith.constant 0 : index
    %c0_107 = arith.constant 0 : index
    %123 = vector.load %arg13[%c0_106, %c0_107] : memref<8x256xf32, #tpu.memory_space<vmem>>, vector<8x256xf32>
    %124 = arith.maximumf %123, %122 : vector<8x256xf32>
    %c0_108 = arith.constant 0 : index
    %c0_109 = arith.constant 0 : index
    %125 = vector.load %arg13[%c0_108, %c0_109] : memref<8x256xf32, #tpu.memory_space<vmem>>, vector<8x256xf32>
    tpu.vector_store %arg13[%c0_108, %c0_109], %124 {strides = array<i32>} : memref<8x256xf32, #tpu.memory_space<vmem>>, vector<8x256xf32>,
    %c9 = arith.constant 9 : index
    %c0_110 = arith.constant 0 : index
    %126 = vector.load %arg2[%c9, %c0_110] : memref<25x256xf32, #tpu.memory_space<vmem>>, vector<1x256xf32>
    %c0_111 = arith.constant 0 : index
    %c0_112 = arith.constant 0 : index
    %127 = vector.load %arg11[%c0_111, %c0_112] : memref<8x256xf32, #tpu.memory_space<vmem>>, vector<8x256xf32>
    %c34_i32 = arith.constant 34 : i32
    %128 = tpu.dynamic_rotate %127 by %c34_i32 dim 1 : vector<8x256xf32>, i32 -> vector<8x256xf32>
    %129 = vector.broadcast %126 : vector<1x256xf32> to vector<8x256xf32>
    %130 = arith.mulf %128, %129 : vector<8x256xf32>
    %c72 = arith.constant 72 : index
    %c0_113 = arith.constant 0 : index
    %131 = vector.load %arg12[%c72, %c0_113] : memref<200x256xf32, #tpu.memory_space<vmem>>, vector<8x256xf32>
    tpu.vector_store %arg12[%c72, %c0_113], %130 {strides = array<i32>} : memref<200x256xf32, #tpu.memory_space<vmem>>, vector<8x256xf32>,
    %c10 = arith.constant 10 : index
    %c0_114 = arith.constant 0 : index
    %132 = vector.load %arg2[%c10, %c0_114] : memref<25x256xf32, #tpu.memory_space<vmem>>, vector<1x256xf32>
    %c0_115 = arith.constant 0 : index
    %c0_116 = arith.constant 0 : index
    %133 = vector.load %arg11[%c0_115, %c0_116] : memref<8x256xf32, #tpu.memory_space<vmem>>, vector<8x256xf32>
    %c33_i32 = arith.constant 33 : i32
    %134 = tpu.dynamic_rotate %133 by %c33_i32 dim 1 : vector<8x256xf32>, i32 -> vector<8x256xf32>
    %135 = vector.broadcast %132 : vector<1x256xf32> to vector<8x256xf32>
    %136 = arith.mulf %134, %135 : vector<8x256xf32>
    %c80 = arith.constant 80 : index
    %c0_117 = arith.constant 0 : index
    %137 = vector.load %arg12[%c80, %c0_117] : memref<200x256xf32, #tpu.memory_space<vmem>>, vector<8x256xf32>
    tpu.vector_store %arg12[%c80, %c0_117], %136 {strides = array<i32>} : memref<200x256xf32, #tpu.memory_space<vmem>>, vector<8x256xf32>,
    %c11 = arith.constant 11 : index
    %c0_118 = arith.constant 0 : index
    %138 = vector.load %arg2[%c11, %c0_118] : memref<25x256xf32, #tpu.memory_space<vmem>>, vector<1x256xf32>
    %c0_119 = arith.constant 0 : index
    %c0_120 = arith.constant 0 : index
    %139 = vector.load %arg11[%c0_119, %c0_120] : memref<8x256xf32, #tpu.memory_space<vmem>>, vector<8x256xf32>
    %c32_i32 = arith.constant 32 : i32
    %140 = tpu.dynamic_rotate %139 by %c32_i32 dim 1 : vector<8x256xf32>, i32 -> vector<8x256xf32>
    %141 = vector.broadcast %138 : vector<1x256xf32> to vector<8x256xf32>
    %142 = arith.mulf %140, %141 : vector<8x256xf32>
    %c88 = arith.constant 88 : index
    %c0_121 = arith.constant 0 : index
    %143 = vector.load %arg12[%c88, %c0_121] : memref<200x256xf32, #tpu.memory_space<vmem>>, vector<8x256xf32>
    tpu.vector_store %arg12[%c88, %c0_121], %142 {strides = array<i32>} : memref<200x256xf32, #tpu.memory_space<vmem>>, vector<8x256xf32>,
    %c12 = arith.constant 12 : index
    %c0_122 = arith.constant 0 : index
    %144 = vector.load %arg2[%c12, %c0_122] : memref<25x256xf32, #tpu.memory_space<vmem>>, vector<1x256xf32>
    %c0_123 = arith.constant 0 : index
    %c0_124 = arith.constant 0 : index
    %145 = vector.load %arg11[%c0_123, %c0_124] : memref<8x256xf32, #tpu.memory_space<vmem>>, vector<8x256xf32>
    %c31_i32 = arith.constant 31 : i32
    %146 = tpu.dynamic_rotate %145 by %c31_i32 dim 1 : vector<8x256xf32>, i32 -> vector<8x256xf32>
    %147 = vector.broadcast %144 : vector<1x256xf32> to vector<8x256xf32>
    %148 = arith.mulf %146, %147 : vector<8x256xf32>
    %c96 = arith.constant 96 : index
    %c0_125 = arith.constant 0 : index
    %149 = vector.load %arg12[%c96, %c0_125] : memref<200x256xf32, #tpu.memory_space<vmem>>, vector<8x256xf32>
    tpu.vector_store %arg12[%c96, %c0_125], %148 {strides = array<i32>} : memref<200x256xf32, #tpu.memory_space<vmem>>, vector<8x256xf32>,
    %c13 = arith.constant 13 : index
    %c0_126 = arith.constant 0 : index
    %150 = vector.load %arg2[%c13, %c0_126] : memref<25x256xf32, #tpu.memory_space<vmem>>, vector<1x256xf32>
    %c0_127 = arith.constant 0 : index
    %c0_128 = arith.constant 0 : index
    %151 = vector.load %arg11[%c0_127, %c0_128] : memref<8x256xf32, #tpu.memory_space<vmem>>, vector<8x256xf32>
    %c30_i32 = arith.constant 30 : i32
    %152 = tpu.dynamic_rotate %151 by %c30_i32 dim 1 : vector<8x256xf32>, i32 -> vector<8x256xf32>
    %153 = vector.broadcast %150 : vector<1x256xf32> to vector<8x256xf32>
    %154 = arith.mulf %152, %153 : vector<8x256xf32>
    %c104 = arith.constant 104 : index
    %c0_129 = arith.constant 0 : index
    %155 = vector.load %arg12[%c104, %c0_129] : memref<200x256xf32, #tpu.memory_space<vmem>>, vector<8x256xf32>
    tpu.vector_store %arg12[%c104, %c0_129], %154 {strides = array<i32>} : memref<200x256xf32, #tpu.memory_space<vmem>>, vector<8x256xf32>,
    %c14 = arith.constant 14 : index
    %c0_130 = arith.constant 0 : index
    %156 = vector.load %arg2[%c14, %c0_130] : memref<25x256xf32, #tpu.memory_space<vmem>>, vector<1x256xf32>
    %c0_131 = arith.constant 0 : index
    %c0_132 = arith.constant 0 : index
    %157 = vector.load %arg11[%c0_131, %c0_132] : memref<8x256xf32, #tpu.memory_space<vmem>>, vector<8x256xf32>
    %c18_i32 = arith.constant 18 : i32
    %158 = tpu.dynamic_rotate %157 by %c18_i32 dim 1 : vector<8x256xf32>, i32 -> vector<8x256xf32>
    %159 = vector.broadcast %156 : vector<1x256xf32> to vector<8x256xf32>
    %160 = arith.mulf %158, %159 : vector<8x256xf32>
    %c112 = arith.constant 112 : index
    %c0_133 = arith.constant 0 : index
    %161 = vector.load %arg12[%c112, %c0_133] : memref<200x256xf32, #tpu.memory_space<vmem>>, vector<8x256xf32>
    tpu.vector_store %arg12[%c112, %c0_133], %160 {strides = array<i32>} : memref<200x256xf32, #tpu.memory_space<vmem>>, vector<8x256xf32>,
    %c15 = arith.constant 15 : index
    %c0_134 = arith.constant 0 : index
    %162 = vector.load %arg2[%c15, %c0_134] : memref<25x256xf32, #tpu.memory_space<vmem>>, vector<1x256xf32>
    %c0_135 = arith.constant 0 : index
    %c0_136 = arith.constant 0 : index
    %163 = vector.load %arg11[%c0_135, %c0_136] : memref<8x256xf32, #tpu.memory_space<vmem>>, vector<8x256xf32>
    %c14_i32 = arith.constant 14 : i32
    %164 = tpu.dynamic_rotate %163 by %c14_i32 dim 1 : vector<8x256xf32>, i32 -> vector<8x256xf32>
    %165 = vector.broadcast %162 : vector<1x256xf32> to vector<8x256xf32>
    %166 = arith.mulf %164, %165 : vector<8x256xf32>
    %c120 = arith.constant 120 : index
    %c0_137 = arith.constant 0 : index
    %167 = vector.load %arg12[%c120, %c0_137] : memref<200x256xf32, #tpu.memory_space<vmem>>, vector<8x256xf32>
    tpu.vector_store %arg12[%c120, %c0_137], %166 {strides = array<i32>} : memref<200x256xf32, #tpu.memory_space<vmem>>, vector<8x256xf32>,
    %c16_138 = arith.constant 16 : index
    %c0_139 = arith.constant 0 : index
    %168 = vector.load %arg2[%c16_138, %c0_139] : memref<25x256xf32, #tpu.memory_space<vmem>>, vector<1x256xf32>
    %c0_140 = arith.constant 0 : index
    %c0_141 = arith.constant 0 : index
    %169 = vector.load %arg11[%c0_140, %c0_141] : memref<8x256xf32, #tpu.memory_space<vmem>>, vector<8x256xf32>
    %c2_i32 = arith.constant 2 : i32
    %170 = tpu.dynamic_rotate %169 by %c2_i32 dim 1 : vector<8x256xf32>, i32 -> vector<8x256xf32>
    %171 = vector.broadcast %168 : vector<1x256xf32> to vector<8x256xf32>
    %172 = arith.mulf %170, %171 : vector<8x256xf32>
    %c128 = arith.constant 128 : index
    %c0_142 = arith.constant 0 : index
    %173 = vector.load %arg12[%c128, %c0_142] : memref<200x256xf32, #tpu.memory_space<vmem>>, vector<8x256xf32>
    tpu.vector_store %arg12[%c128, %c0_142], %172 {strides = array<i32>} : memref<200x256xf32, #tpu.memory_space<vmem>>, vector<8x256xf32>,
    %c17 = arith.constant 17 : index
    %c0_143 = arith.constant 0 : index
    %174 = vector.load %arg2[%c17, %c0_143] : memref<25x256xf32, #tpu.memory_space<vmem>>, vector<1x256xf32>
    %c0_144 = arith.constant 0 : index
    %c0_145 = arith.constant 0 : index
    %175 = vector.load %arg11[%c0_144, %c0_145] : memref<8x256xf32, #tpu.memory_space<vmem>>, vector<8x256xf32>
    %c254_i32 = arith.constant 254 : i32
    %176 = tpu.dynamic_rotate %175 by %c254_i32 dim 1 : vector<8x256xf32>, i32 -> vector<8x256xf32>
    %177 = vector.broadcast %174 : vector<1x256xf32> to vector<8x256xf32>
    %178 = arith.mulf %176, %177 : vector<8x256xf32>
    %c136 = arith.constant 136 : index
    %c0_146 = arith.constant 0 : index
    %179 = vector.load %arg12[%c136, %c0_146] : memref<200x256xf32, #tpu.memory_space<vmem>>, vector<8x256xf32>
    tpu.vector_store %arg12[%c136, %c0_146], %178 {strides = array<i32>} : memref<200x256xf32, #tpu.memory_space<vmem>>, vector<8x256xf32>,
    %c18 = arith.constant 18 : index
    %c0_147 = arith.constant 0 : index
    %180 = vector.load %arg2[%c18, %c0_147] : memref<25x256xf32, #tpu.memory_space<vmem>>, vector<1x256xf32>
    %c0_148 = arith.constant 0 : index
    %c0_149 = arith.constant 0 : index
    %181 = vector.load %arg11[%c0_148, %c0_149] : memref<8x256xf32, #tpu.memory_space<vmem>>, vector<8x256xf32>
    %c242_i32 = arith.constant 242 : i32
    %182 = tpu.dynamic_rotate %181 by %c242_i32 dim 1 : vector<8x256xf32>, i32 -> vector<8x256xf32>
    %183 = vector.broadcast %180 : vector<1x256xf32> to vector<8x256xf32>
    %184 = arith.mulf %182, %183 : vector<8x256xf32>
    %c144 = arith.constant 144 : index
    %c0_150 = arith.constant 0 : index
    %185 = vector.load %arg12[%c144, %c0_150] : memref<200x256xf32, #tpu.memory_space<vmem>>, vector<8x256xf32>
    tpu.vector_store %arg12[%c144, %c0_150], %184 {strides = array<i32>} : memref<200x256xf32, #tpu.memory_space<vmem>>, vector<8x256xf32>,
    %c19 = arith.constant 19 : index
    %c0_151 = arith.constant 0 : index
    %186 = vector.load %arg2[%c19, %c0_151] : memref<25x256xf32, #tpu.memory_space<vmem>>, vector<1x256xf32>
    %c0_152 = arith.constant 0 : index
    %c0_153 = arith.constant 0 : index
    %187 = vector.load %arg11[%c0_152, %c0_153] : memref<8x256xf32, #tpu.memory_space<vmem>>, vector<8x256xf32>
    %c238_i32 = arith.constant 238 : i32
    %188 = tpu.dynamic_rotate %187 by %c238_i32 dim 1 : vector<8x256xf32>, i32 -> vector<8x256xf32>
    %189 = vector.broadcast %186 : vector<1x256xf32> to vector<8x256xf32>
    %190 = arith.mulf %188, %189 : vector<8x256xf32>
    %c152 = arith.constant 152 : index
    %c0_154 = arith.constant 0 : index
    %191 = vector.load %arg12[%c152, %c0_154] : memref<200x256xf32, #tpu.memory_space<vmem>>, vector<8x256xf32>
    tpu.vector_store %arg12[%c152, %c0_154], %190 {strides = array<i32>} : memref<200x256xf32, #tpu.memory_space<vmem>>, vector<8x256xf32>,
    %c20 = arith.constant 20 : index
    %c0_155 = arith.constant 0 : index
    %192 = vector.load %arg2[%c20, %c0_155] : memref<25x256xf32, #tpu.memory_space<vmem>>, vector<1x256xf32>
    %c0_156 = arith.constant 0 : index
    %c0_157 = arith.constant 0 : index
    %193 = vector.load %arg11[%c0_156, %c0_157] : memref<8x256xf32, #tpu.memory_space<vmem>>, vector<8x256xf32>
    %c226_i32 = arith.constant 226 : i32
    %194 = tpu.dynamic_rotate %193 by %c226_i32 dim 1 : vector<8x256xf32>, i32 -> vector<8x256xf32>
    %195 = vector.broadcast %192 : vector<1x256xf32> to vector<8x256xf32>
    %196 = arith.mulf %194, %195 : vector<8x256xf32>
    %c160 = arith.constant 160 : index
    %c0_158 = arith.constant 0 : index
    %197 = vector.load %arg12[%c160, %c0_158] : memref<200x256xf32, #tpu.memory_space<vmem>>, vector<8x256xf32>
    tpu.vector_store %arg12[%c160, %c0_158], %196 {strides = array<i32>} : memref<200x256xf32, #tpu.memory_space<vmem>>, vector<8x256xf32>,
    %c21 = arith.constant 21 : index
    %c0_159 = arith.constant 0 : index
    %198 = vector.load %arg2[%c21, %c0_159] : memref<25x256xf32, #tpu.memory_space<vmem>>, vector<1x256xf32>
    %c0_160 = arith.constant 0 : index
    %c0_161 = arith.constant 0 : index
    %199 = vector.load %arg11[%c0_160, %c0_161] : memref<8x256xf32, #tpu.memory_space<vmem>>, vector<8x256xf32>
    %c225_i32 = arith.constant 225 : i32
    %200 = tpu.dynamic_rotate %199 by %c225_i32 dim 1 : vector<8x256xf32>, i32 -> vector<8x256xf32>
    %201 = vector.broadcast %198 : vector<1x256xf32> to vector<8x256xf32>
    %202 = arith.mulf %200, %201 : vector<8x256xf32>
    %c168 = arith.constant 168 : index
    %c0_162 = arith.constant 0 : index
    %203 = vector.load %arg12[%c168, %c0_162] : memref<200x256xf32, #tpu.memory_space<vmem>>, vector<8x256xf32>
    tpu.vector_store %arg12[%c168, %c0_162], %202 {strides = array<i32>} : memref<200x256xf32, #tpu.memory_space<vmem>>, vector<8x256xf32>,
    %c22 = arith.constant 22 : index
    %c0_163 = arith.constant 0 : index
    %204 = vector.load %arg2[%c22, %c0_163] : memref<25x256xf32, #tpu.memory_space<vmem>>, vector<1x256xf32>
    %c0_164 = arith.constant 0 : index
    %c0_165 = arith.constant 0 : index
    %205 = vector.load %arg11[%c0_164, %c0_165] : memref<8x256xf32, #tpu.memory_space<vmem>>, vector<8x256xf32>
    %c224_i32 = arith.constant 224 : i32
    %206 = tpu.dynamic_rotate %205 by %c224_i32 dim 1 : vector<8x256xf32>, i32 -> vector<8x256xf32>
    %207 = vector.broadcast %204 : vector<1x256xf32> to vector<8x256xf32>
    %208 = arith.mulf %206, %207 : vector<8x256xf32>
    %c176 = arith.constant 176 : index
    %c0_166 = arith.constant 0 : index
    %209 = vector.load %arg12[%c176, %c0_166] : memref<200x256xf32, #tpu.memory_space<vmem>>, vector<8x256xf32>
    tpu.vector_store %arg12[%c176, %c0_166], %208 {strides = array<i32>} : memref<200x256xf32, #tpu.memory_space<vmem>>, vector<8x256xf32>,
    %c23 = arith.constant 23 : index
    %c0_167 = arith.constant 0 : index
    %210 = vector.load %arg2[%c23, %c0_167] : memref<25x256xf32, #tpu.memory_space<vmem>>, vector<1x256xf32>
    %c0_168 = arith.constant 0 : index
    %c0_169 = arith.constant 0 : index
    %211 = vector.load %arg11[%c0_168, %c0_169] : memref<8x256xf32, #tpu.memory_space<vmem>>, vector<8x256xf32>
    %c223_i32 = arith.constant 223 : i32
    %212 = tpu.dynamic_rotate %211 by %c223_i32 dim 1 : vector<8x256xf32>, i32 -> vector<8x256xf32>
    %213 = vector.broadcast %210 : vector<1x256xf32> to vector<8x256xf32>
    %214 = arith.mulf %212, %213 : vector<8x256xf32>
    %c184 = arith.constant 184 : index
    %c0_170 = arith.constant 0 : index
    %215 = vector.load %arg12[%c184, %c0_170] : memref<200x256xf32, #tpu.memory_space<vmem>>, vector<8x256xf32>
    tpu.vector_store %arg12[%c184, %c0_170], %214 {strides = array<i32>} : memref<200x256xf32, #tpu.memory_space<vmem>>, vector<8x256xf32>,
    %c24_171 = arith.constant 24 : index
    %c0_172 = arith.constant 0 : index
    %216 = vector.load %arg2[%c24_171, %c0_172] : memref<25x256xf32, #tpu.memory_space<vmem>>, vector<1x256xf32>
    %c0_173 = arith.constant 0 : index
    %c0_174 = arith.constant 0 : index
    %217 = vector.load %arg11[%c0_173, %c0_174] : memref<8x256xf32, #tpu.memory_space<vmem>>, vector<8x256xf32>
    %c222_i32 = arith.constant 222 : i32
    %218 = tpu.dynamic_rotate %217 by %c222_i32 dim 1 : vector<8x256xf32>, i32 -> vector<8x256xf32>
    %219 = vector.broadcast %216 : vector<1x256xf32> to vector<8x256xf32>
    %220 = arith.mulf %218, %219 : vector<8x256xf32>
    %c192 = arith.constant 192 : index
    %c0_175 = arith.constant 0 : index
    %221 = vector.load %arg12[%c192, %c0_175] : memref<200x256xf32, #tpu.memory_space<vmem>>, vector<8x256xf32>
    tpu.vector_store %arg12[%c192, %c0_175], %220 {strides = array<i32>} : memref<200x256xf32, #tpu.memory_space<vmem>>, vector<8x256xf32>,
    %c0_176 = arith.constant 0 : index
    %c0_177 = arith.constant 0 : index
    %222 = vector.load %arg6[%c0_176, %c0_177] : memref<16x200xf32, #tpu.memory_space<vmem>>, vector<16x200xf32>
    %c0_178 = arith.constant 0 : index
    %c0_179 = arith.constant 0 : index
    %223 = vector.load %arg12[%c0_178, %c0_179] : memref<200x256xf32, #tpu.memory_space<vmem>>, vector<200x256xf32>
    %cst_180 = arith.constant dense<0.000000e+00> : vector<16x256xf32>
    %224 = tpu.matmul %222, %223, %cst_180 {dimension_numbers = #tpu.dot_dimension_numbers<[1], [0], [0], [1], [0, 0, 1, 1], [], []>} : vector<16x200xf32>, vector<200x256xf32>, vector<16x256xf32> -> vector<16x256xf32>
    %c0_181 = arith.constant 0 : index
    %c0_182 = arith.constant 0 : index
    %225 = vector.load %arg7[%c0_181, %c0_182] : memref<16x1xf32, #tpu.memory_space<vmem>>, vector<16x1xf32>
    %226 = vector.broadcast %225 : vector<16x1xf32> to vector<16x256xf32>
    %227 = arith.addf %224, %226 : vector<16x256xf32>
    %c0_183 = arith.constant 0 : index
    %c8_184 = arith.constant 8 : index
    %c0_185 = arith.constant 0 : index
    %228 = vector.load %arg10[%c0_183, %c8_184, %c0_185] : memref<1x28x256xf32, #tpu.memory_space<vmem>>, vector<1x16x256xf32>
    %229 = vector.shape_cast %228 : vector<1x16x256xf32> to vector<16x256xf32>
    %230 = vector.shape_cast %227 : vector<16x256xf32> to vector<1x16x256xf32>
    tpu.vector_store %arg10[%c0_183, %c8_184, %c0_185], %230 {strides = array<i32>} : memref<1x28x256xf32, #tpu.memory_space<vmem>>, vector<1x16x256xf32>,
    %c0_186 = arith.constant 0 : index
    %c0_187 = arith.constant 0 : index
    %231 = vector.load %arg8[%c0_186, %c0_187] : memref<4x8xf32, #tpu.memory_space<vmem>>, vector<4x8xf32>
    %c0_188 = arith.constant 0 : index
    %c0_189 = arith.constant 0 : index
    %232 = vector.load %arg13[%c0_188, %c0_189] : memref<8x256xf32, #tpu.memory_space<vmem>>, vector<8x256xf32>
    %cst_190 = arith.constant dense<0.000000e+00> : vector<4x256xf32>
    %233 = tpu.matmul %231, %232, %cst_190 {dimension_numbers = #tpu.dot_dimension_numbers<[1], [0], [0], [1], [0, 0, 1, 1], [], []>} : vector<4x8xf32>, vector<8x256xf32>, vector<4x256xf32> -> vector<4x256xf32>
    %c0_191 = arith.constant 0 : index
    %c0_192 = arith.constant 0 : index
    %234 = vector.load %arg9[%c0_191, %c0_192] : memref<4x1xf32, #tpu.memory_space<vmem>>, vector<4x1xf32>
    %235 = vector.broadcast %234 : vector<4x1xf32> to vector<4x256xf32>
    %236 = arith.addf %233, %235 : vector<4x256xf32>
    %c0_193 = arith.constant 0 : index
    %c24_194 = arith.constant 24 : index
    %c0_195 = arith.constant 0 : index
    %237 = vector.load %arg10[%c0_193, %c24_194, %c0_195] : memref<1x28x256xf32, #tpu.memory_space<vmem>>, vector<1x4x256xf32>
    %238 = vector.shape_cast %237 : vector<1x4x256xf32> to vector<4x256xf32>
    %239 = vector.shape_cast %236 : vector<4x256xf32> to vector<1x4x256xf32>
    tpu.vector_store %arg10[%c0_193, %c24_194, %c0_195], %239 {strides = array<i32>} : memref<1x28x256xf32, #tpu.memory_space<vmem>>, vector<1x4x256xf32>,
    return
  }
  func.func @transform_0(%arg0: i32) -> (i32, i32, i32) {
    %c0_i32 = arith.constant 0 : i32
    %c0_i32_0 = arith.constant 0 : i32
    %c0_i32_1 = arith.constant 0 : i32
    return %arg0, %c0_i32, %c0_i32_0 : i32, i32, i32
  }
  func.func @transform_1(%arg0: i32) -> (i32, i32) {
    %c0_i32 = arith.constant 0 : i32
    %c0_i32_0 = arith.constant 0 : i32
    %c0_i32_1 = arith.constant 0 : i32
    return %c0_i32, %c0_i32_0 : i32, i32
  }
  func.func @transform_2(%arg0: i32) -> (i32, i32) {
    %c0_i32 = arith.constant 0 : i32
    %c0_i32_0 = arith.constant 0 : i32
    %c0_i32_1 = arith.constant 0 : i32
    return %c0_i32, %c0_i32_0 : i32, i32
  }
  func.func @transform_3(%arg0: i32) -> (i32, i32) {
    %c0_i32 = arith.constant 0 : i32
    %c0_i32_0 = arith.constant 0 : i32
    %c0_i32_1 = arith.constant 0 : i32
    return %c0_i32, %c0_i32_0 : i32, i32
  }
  func.func @transform_4(%arg0: i32) -> (i32, i32) {
    %c0_i32 = arith.constant 0 : i32
    %c0_i32_0 = arith.constant 0 : i32
    %c0_i32_1 = arith.constant 0 : i32
    return %c0_i32, %c0_i32_0 : i32, i32
  }
  func.func @transform_5(%arg0: i32) -> (i32, i32) {
    %c0_i32 = arith.constant 0 : i32
    %c0_i32_0 = arith.constant 0 : i32
    %c0_i32_1 = arith.constant 0 : i32
    return %c0_i32, %c0_i32_0 : i32, i32
  }
  func.func @transform_6(%arg0: i32) -> (i32, i32) {
    %c0_i32 = arith.constant 0 : i32
    %c0_i32_0 = arith.constant 0 : i32
    %c0_i32_1 = arith.constant 0 : i32
    return %c0_i32, %c0_i32_0 : i32, i32
  }
  func.func @transform_7(%arg0: i32) -> (i32, i32) {
    %c0_i32 = arith.constant 0 : i32
    %c0_i32_0 = arith.constant 0 : i32
    %c0_i32_1 = arith.constant 0 : i32
    return %c0_i32, %c0_i32_0 : i32, i32
  }
  func.func @transform_8(%arg0: i32) -> (i32, i32) {
    %c0_i32 = arith.constant 0 : i32
    %c0_i32_0 = arith.constant 0 : i32
    %c0_i32_1 = arith.constant 0 : i32
    return %c0_i32, %c0_i32_0 : i32, i32
  }
  func.func @transform_9(%arg0: i32) -> (i32, i32, i32) {
    %c0_i32 = arith.constant 0 : i32
    %c0_i32_0 = arith.constant 0 : i32
    %c0_i32_1 = arith.constant 0 : i32
    return %arg0, %c0_i32, %c0_i32_0 : i32, i32, i32
  }
}

</mosaic_0001>

<llo_original>
// kernel: inception_forward.1
$region0: #{inception_forward.1}
  #allocation0 [shape = 'u32[]', space=smem, size = 0x4, offset = 0x4, fixed_abs, tag = 'smem constant byte address 0x4 - core index']
  #allocation1 [shape = 'u32[144,128]{1,0:T(1,128)}', space=vmem, size = 0x12000, scoped, tag = 'internal scratch']
  #allocation2 [shape = 'f32[8,256]{1,0:T(8,128)}', space=vmem, size = 0x2000, scoped, tag = 'scratch operand']
  #allocation3 [shape = 'f32[200,256]{1,0:T(8,128)}', space=vmem, size = 0x32000, scoped, tag = 'scratch operand']
  #allocation4 [shape = 'f32[8,256]{1,0:T(8,128)}', space=vmem, size = 0x2000, scoped, tag = 'scratch operand']
  %s0 = inlined_call_operand.vmem [shape: f32[2,8,256], index: 0, kind: input, shape index: {}]
  %s1 = inlined_call_operand.vmem [shape: f32[25,256], index: 1, kind: input, shape index: {}]
  %s2 = inlined_call_operand.vmem [shape: f32[9,256], index: 2, kind: input, shape index: {}]
  %s3 = inlined_call_operand.vmem [shape: f32[16,8], index: 3, kind: input, shape index: {}]
  %s4 = inlined_call_operand.vmem [shape: f32[16,1], index: 4, kind: input, shape index: {}]
  %s5 = inlined_call_operand.vmem [shape: f32[16,200], index: 5, kind: input, shape index: {}]
  %s6 = inlined_call_operand.vmem [shape: f32[16,1], index: 6, kind: input, shape index: {}]
  %s7 = inlined_call_operand.vmem [shape: f32[4,8], index: 7, kind: input, shape index: {}]
  %s8 = inlined_call_operand.vmem [shape: f32[4,1], index: 8, kind: input, shape index: {}]
  %s9 = inlined_call_operand.vmem [shape: f32[2,28,256], index: 9, kind: output, shape index: {}]
  %s10 = sld [smem:[#allocation0]]
  $region69: #{inception_forward.1} parent=0
    _
  %s12 = ssub.s32 1, %s10
  %s13 = scalar_select 0, %s12, %s10
  loop: start=0, step=1, limit=4
  $region2: #{inception_forward.1} parent=0 // loop_pre_header
    _
  $region3: #{inception_forward.1} parent=0 // loop_header
    %s15 = sphi 0, %s19
    %p16 = scmp.ge.s32.totalorder %s15, 4
    %s25 = sphi 0, %s27
    %s28 = sphi 0, %s25
    %s29 = sphi 0, %s28
    %s45 = sphi 0, %s29
    %s49 = sphi 0, %s49
    %s51 = sphi 0, %s49
    %s52 = sphi 0, %s51
    %s66 = sphi 0, %s52
    %s70 = sphi 0, %s70
    %s72 = sphi 0, %s70
    %s73 = sphi 0, %s72
    %s87 = sphi 0, %s73
    %s91 = sphi 0, %s91
    %s93 = sphi 0, %s91
    %s94 = sphi 0, %s93
    %s108 = sphi 0, %s94
    %s112 = sphi 0, %s112
    %s114 = sphi 0, %s112
    %s115 = sphi 0, %s114
    %s129 = sphi 0, %s115
    %s133 = sphi 0, %s133
    %s135 = sphi 0, %s133
    %s136 = sphi 0, %s135
    %s150 = sphi 0, %s136
    %s154 = sphi 0, %s154
    %s156 = sphi 0, %s154
    %s157 = sphi 0, %s156
    %s171 = sphi 0, %s157
    %s175 = sphi 0, %s175
    %s177 = sphi 0, %s175
    %s178 = sphi 0, %s177
    %s192 = sphi 0, %s178
    %s196 = sphi 0, %s196
    %s198 = sphi 0, %s196
    %s199 = sphi 0, %s198
    %s213 = sphi 0, %s199
    %s219 = sphi 0, %s221
    %s222 = sphi 0, %s219
    %s223 = sphi 0, %s222
    %s239 = sphi 0, %s223
  $region4: #{inception_forward.1} parent=0 // loop_header_branch
    %18 = sbr.rel (%p16) target = $region8
  $region5: #{inception_forward.1} parent=0 // loop_body
    %s20 = ssub.s32 %s15, 1
    %s21 = ssub.s32 %s15, 2
    %s22 = sadd.s32 %s15, 1
    %s23 = ssub.s32 %s15, %s22
    %p24 = scmp.eq.s32.totalorder %s23, 0
    %s26 = sadd.s32 %s25, 1
    %s27 = scalar_select %p24, %s25, %s26
    %p30 = pneg %p24
    %p31 = scmp.eq.s32.totalorder %s15, 1
    %p32 = por %p30, %p31
    %p33 = scmp.ne.s32.totalorder %s25, %s28
    %p34 = scmp.eq.s32.totalorder %s15, 0
    %p35 = por %p33, %p34
    %p36 = scmp.ne.s32.totalorder %s25, %s28
    %p37 = scmp.eq.s32.totalorder %s20, 1
    %p38 = por %p36, %p37
    %p39 = scmp.ne.s32.totalorder %s28, %s29
    %p40 = scmp.eq.s32.totalorder %s20, 0
    %p41 = por %p39, %p40
    %p42 = scmp.ne.s32.totalorder %s28, %s29
    %p43 = scmp.eq.s32.totalorder %s21, 1
    %p44 = por %p42, %p43
    %p46 = scmp.ne.s32.totalorder %s29, %s45
    %p47 = scmp.eq.s32.totalorder %s21, 0
    %p48 = por %p46, %p47
    %s50 = sadd.s32 %s49, 1
    %p53 = scmp.eq.s32.totalorder %s15, 1
    %p54 = scmp.ne.s32.totalorder %s49, %s51
    %p55 = scmp.eq.s32.totalorder %s15, 0
    %p56 = por %p54, %p55
    %p57 = scmp.ne.s32.totalorder %s49, %s51
    %p58 = scmp.eq.s32.totalorder %s20, 1
    %p59 = por %p57, %p58
    %p60 = scmp.ne.s32.totalorder %s51, %s52
    %p61 = scmp.eq.s32.totalorder %s20, 0
    %p62 = por %p60, %p61
    %p63 = scmp.ne.s32.totalorder %s51, %s52
    %p64 = scmp.eq.s32.totalorder %s21, 1
    %p65 = por %p63, %p64
    %p67 = scmp.ne.s32.totalorder %s52, %s66
    %p68 = scmp.eq.s32.totalorder %s21, 0
    %p69 = por %p67, %p68
    %s71 = sadd.s32 %s70, 1
    %p74 = scmp.eq.s32.totalorder %s15, 1
    %p75 = scmp.ne.s32.totalorder %s70, %s72
    %p76 = scmp.eq.s32.totalorder %s15, 0
    %p77 = por %p75, %p76
    %p78 = scmp.ne.s32.totalorder %s70, %s72
    %p79 = scmp.eq.s32.totalorder %s20, 1
    %p80 = por %p78, %p79
    %p81 = scmp.ne.s32.totalorder %s72, %s73
    %p82 = scmp.eq.s32.totalorder %s20, 0
    %p83 = por %p81, %p82
    %p84 = scmp.ne.s32.totalorder %s72, %s73
    %p85 = scmp.eq.s32.totalorder %s21, 1
    %p86 = por %p84, %p85
    %p88 = scmp.ne.s32.totalorder %s73, %s87
    %p89 = scmp.eq.s32.totalorder %s21, 0
    %p90 = por %p88, %p89
    %s92 = sadd.s32 %s91, 1
    %p95 = scmp.eq.s32.totalorder %s15, 1
    %p96 = scmp.ne.s32.totalorder %s91, %s93
    %p97 = scmp.eq.s32.totalorder %s15, 0
    %p98 = por %p96, %p97
    %p99 = scmp.ne.s32.totalorder %s91, %s93
    %p100 = scmp.eq.s32.totalorder %s20, 1
    %p101 = por %p99, %p100
    %p102 = scmp.ne.s32.totalorder %s93, %s94
    %p103 = scmp.eq.s32.totalorder %s20, 0
    %p104 = por %p102, %p103
    %p105 = scmp.ne.s32.totalorder %s93, %s94
    %p106 = scmp.eq.s32.totalorder %s21, 1
    %p107 = por %p105, %p106
    %p109 = scmp.ne.s32.totalorder %s94, %s108
    %p110 = scmp.eq.s32.totalorder %s21, 0
    %p111 = por %p109, %p110
    %s113 = sadd.s32 %s112, 1
    %p116 = scmp.eq.s32.totalorder %s15, 1
    %p117 = scmp.ne.s32.totalorder %s112, %s114
    %p118 = scmp.eq.s32.totalorder %s15, 0
    %p119 = por %p117, %p118
    %p120 = scmp.ne.s32.totalorder %s112, %s114
    %p121 = scmp.eq.s32.totalorder %s20, 1
    %p122 = por %p120, %p121
    %p123 = scmp.ne.s32.totalorder %s114, %s115
    %p124 = scmp.eq.s32.totalorder %s20, 0
    %p125 = por %p123, %p124
    %p126 = scmp.ne.s32.totalorder %s114, %s115
    %p127 = scmp.eq.s32.totalorder %s21, 1
    %p128 = por %p126, %p127
    %p130 = scmp.ne.s32.totalorder %s115, %s129
    %p131 = scmp.eq.s32.totalorder %s21, 0
    %p132 = por %p130, %p131
    %s134 = sadd.s32 %s133, 1
    %p137 = scmp.eq.s32.totalorder %s15, 1
    %p138 = scmp.ne.s32.totalorder %s133, %s135
    %p139 = scmp.eq.s32.totalorder %s15, 0
    %p140 = por %p138, %p139
    %p141 = scmp.ne.s32.totalorder %s133, %s135
    %p142 = scmp.eq.s32.totalorder %s20, 1
    %p143 = por %p141, %p142
    %p144 = scmp.ne.s32.totalorder %s135, %s136
    %p145 = scmp.eq.s32.totalorder %s20, 0
    %p146 = por %p144, %p145
    %p147 = scmp.ne.s32.totalorder %s135, %s136
    %p148 = scmp.eq.s32.totalorder %s21, 1
    %p149 = por %p147, %p148
    %p151 = scmp.ne.s32.totalorder %s136, %s150
    %p152 = scmp.eq.s32.totalorder %s21, 0
    %p153 = por %p151, %p152
    %s155 = sadd.s32 %s154, 1
    %p158 = scmp.eq.s32.totalorder %s15, 1
    %p159 = scmp.ne.s32.totalorder %s154, %s156
    %p160 = scmp.eq.s32.totalorder %s15, 0
    %p161 = por %p159, %p160
    %p162 = scmp.ne.s32.totalorder %s154, %s156
    %p163 = scmp.eq.s32.totalorder %s20, 1
    %p164 = por %p162, %p163
    %p165 = scmp.ne.s32.totalorder %s156, %s157
    %p166 = scmp.eq.s32.totalorder %s20, 0
    %p167 = por %p165, %p166
    %p168 = scmp.ne.s32.totalorder %s156, %s157
    %p169 = scmp.eq.s32.totalorder %s21, 1
    %p170 = por %p168, %p169
    %p172 = scmp.ne.s32.totalorder %s157, %s171
    %p173 = scmp.eq.s32.totalorder %s21, 0
    %p174 = por %p172, %p173
    %s176 = sadd.s32 %s175, 1
    %p179 = scmp.eq.s32.totalorder %s15, 1
    %p180 = scmp.ne.s32.totalorder %s175, %s177
    %p181 = scmp.eq.s32.totalorder %s15, 0
    %p182 = por %p180, %p181
    %p183 = scmp.ne.s32.totalorder %s175, %s177
    %p184 = scmp.eq.s32.totalorder %s20, 1
    %p185 = por %p183, %p184
    %p186 = scmp.ne.s32.totalorder %s177, %s178
    %p187 = scmp.eq.s32.totalorder %s20, 0
    %p188 = por %p186, %p187
    %p189 = scmp.ne.s32.totalorder %s177, %s178
    %p190 = scmp.eq.s32.totalorder %s21, 1
    %p191 = por %p189, %p190
    %p193 = scmp.ne.s32.totalorder %s178, %s192
    %p194 = scmp.eq.s32.totalorder %s21, 0
    %p195 = por %p193, %p194
    %s197 = sadd.s32 %s196, 1
    %p200 = scmp.eq.s32.totalorder %s15, 1
    %p201 = scmp.ne.s32.totalorder %s196, %s198
    %p202 = scmp.eq.s32.totalorder %s15, 0
    %p203 = por %p201, %p202
    %p204 = scmp.ne.s32.totalorder %s196, %s198
    %p205 = scmp.eq.s32.totalorder %s20, 1
    %p206 = por %p204, %p205
    %p207 = scmp.ne.s32.totalorder %s198, %s199
    %p208 = scmp.eq.s32.totalorder %s20, 0
    %p209 = por %p207, %p208
    %p210 = scmp.ne.s32.totalorder %s198, %s199
    %p211 = scmp.eq.s32.totalorder %s21, 1
    %p212 = por %p210, %p211
    %p214 = scmp.ne.s32.totalorder %s199, %s213
    %p215 = scmp.eq.s32.totalorder %s21, 0
    %p216 = por %p214, %p215
    %s217 = ssub.s32 %s15, %s22
    %p218 = scmp.eq.s32.totalorder %s217, 0
    %s220 = sadd.s32 %s219, 1
    %s221 = scalar_select %p218, %s219, %s220
    %p224 = pneg %p218
    %p225 = scmp.eq.s32.totalorder %s15, 1
    %p226 = por %p224, %p225
    %p227 = scmp.ne.s32.totalorder %s219, %s222
    %p228 = scmp.eq.s32.totalorder %s15, 0
    %p229 = por %p227, %p228
    %p230 = scmp.ne.s32.totalorder %s219, %s222
    %p231 = scmp.eq.s32.totalorder %s20, 1
    %p232 = por %p230, %p231
    %p233 = scmp.ne.s32.totalorder %s222, %s223
    %p234 = scmp.eq.s32.totalorder %s20, 0
    %p235 = por %p233, %p234
    %p236 = scmp.ne.s32.totalorder %s222, %s223
    %p237 = scmp.eq.s32.totalorder %s21, 1
    %p238 = por %p236, %p237
    %p240 = scmp.ne.s32.totalorder %s223, %s239
    %p241 = scmp.eq.s32.totalorder %s21, 0
    %p242 = por %p240, %p241
    %p243 = scmp.le.s32.totalorder 1, %s15
    %p244 = scmp.lt.s32.totalorder %s15, 3
    %p245 = pnand %p243, %p244
    %p246 = pneg %p245
    // Predicated region
    $region9: #{inception_forward.1} parent=5 // pred_check
      _
    $region10: #{inception_forward.1} parent=5 // pred_check_branch
      %248 = sbr.rel (%p245) target = $region12
    $region11: #{inception_forward.1} parent=5 // pred_region
      %s249 = ssub.s32 %s15, 1
      // Predicated region
      $region13: #{inception_forward.1} parent=11 // pred_check
        %p250 = pneg %p62
      $region14: #{inception_forward.1} parent=11 // pred_check_branch
        %252 = sbr.rel (%p250) target = $region16
      $region15: #{inception_forward.1} parent=11 // pred_region
        _
      $region16: #{inception_forward.1} parent=11 // pred_fallthru
        _
      // Predicated region
      $region17: #{inception_forward.1} parent=11 // pred_check
        %p253 = pneg %p83
      $region18: #{inception_forward.1} parent=11 // pred_check_branch
        %255 = sbr.rel (%p253) target = $region20
      $region19: #{inception_forward.1} parent=11 // pred_region
        _
      $region20: #{inception_forward.1} parent=11 // pred_fallthru
        _
      // Predicated region
      $region21: #{inception_forward.1} parent=11 // pred_check
        %p256 = pneg %p104
      $region22: #{inception_forward.1} parent=11 // pred_check_branch
        %258 = sbr.rel (%p256) target = $region24
      $region23: #{inception_forward.1} parent=11 // pred_region
        _
      $region24: #{inception_forward.1} parent=11 // pred_fallthru
        _
      // Predicated region
      $region25: #{inception_forward.1} parent=11 // pred_check
        %p259 = pneg %p125
      $region26: #{inception_forward.1} parent=11 // pred_check_branch
        %261 = sbr.rel (%p259) target = $region28
      $region27: #{inception_forward.1} parent=11 // pred_region
        _
      $region28: #{inception_forward.1} parent=11 // pred_fallthru
        _
      // Predicated region
      $region29: #{inception_forward.1} parent=11 // pred_check
        %p262 = pneg %p146
      $region30: #{inception_forward.1} parent=11 // pred_check_branch
        %264 = sbr.rel (%p262) target = $region32
      $region31: #{inception_forward.1} parent=11 // pred_region
        _
      $region32: #{inception_forward.1} parent=11 // pred_fallthru
        _
      // Predicated region
      $region33: #{inception_forward.1} parent=11 // pred_check
        %p265 = pneg %p167
      $region34: #{inception_forward.1} parent=11 // pred_check_branch
        %267 = sbr.rel (%p265) target = $region36
      $region35: #{inception_forward.1} parent=11 // pred_region
        _
      $region36: #{inception_forward.1} parent=11 // pred_fallthru
        _
      // Predicated region
      $region37: #{inception_forward.1} parent=11 // pred_check
        %p268 = pneg %p188
      $region38: #{inception_forward.1} parent=11 // pred_check_branch
        %270 = sbr.rel (%p268) target = $region40
      $region39: #{inception_forward.1} parent=11 // pred_region
        _
      $region40: #{inception_forward.1} parent=11 // pred_fallthru
        _
      // Predicated region
      $region41: #{inception_forward.1} parent=11 // pred_check
        %p271 = pneg %p209
      $region42: #{inception_forward.1} parent=11 // pred_check_branch
        %273 = sbr.rel (%p271) target = $region44
      $region43: #{inception_forward.1} parent=11 // pred_region
        _
      $region44: #{inception_forward.1} parent=11 // pred_fallthru
        _
    $region12: #{inception_forward.1} parent=5 // pred_fallthru
      _
    %p274 = scmp.lt.s32.totalorder %s15, 2
    // Predicated region
    $region45: #{inception_forward.1} parent=5 // pred_check
      %p275 = pneg %p274
    $region46: #{inception_forward.1} parent=5 // pred_check_branch
      %277 = sbr.rel (%p275) target = $region48
    $region47: #{inception_forward.1} parent=5 // pred_region
      // Predicated region
      $region49: #{inception_forward.1} parent=47 // pred_check
        %p278 = pneg %p35
      $region50: #{inception_forward.1} parent=47 // pred_check_branch
        %280 = sbr.rel (%p278) target = $region52
      $region51: #{inception_forward.1} parent=47 // pred_region
        %p281 = scmp.lt.s32.totalorder %s15, 1
        %s282 = scalar_select %p281, %s15, 1
        %s283 = smul.addr %s282, 2
        %s284 = smul.addr %s283, 8
        %s285 = scalar_lea.vmem %s0, %s284
      $region52: #{inception_forward.1} parent=47 // pred_fallthru
        _
    $region48: #{inception_forward.1} parent=5 // pred_fallthru
      _
    %p286 = scmp.le.s32.totalorder 1, %s15
    %p287 = scmp.lt.s32.totalorder %s15, 3
    %p288 = pnand %p286, %p287
    %p289 = pneg %p288
    // Predicated region
    $region53: #{inception_forward.1} parent=5 // pred_check
      _
    $region54: #{inception_forward.1} parent=5 // pred_check_branch
      %291 = sbr.rel (%p288) target = $region56
    $region55: #{inception_forward.1} parent=5 // pred_region
      %s292 = ssub.s32 %s15, 1
      %p293 = scmp.lt.s32.totalorder %s20, 1
      %s294 = scalar_select %p293, %s20, 1
      %s295 = smul.addr %s294, 2
      %s296 = smul.addr %s295, 8
      %s297 = scalar_lea.vmem %s0, %s296
      %p298 = pneg %p41
      %p299 = pneg %p38
      %p300 = pneg %p62
      %p301 = pneg %p59
      %p302 = pneg %p83
      %p303 = pneg %p80
      %p304 = pneg %p104
      %p305 = pneg %p101
      %p306 = pneg %p125
      %p307 = pneg %p122
      %p308 = pneg %p146
      %p309 = pneg %p143
      %p310 = pneg %p167
      %p311 = pneg %p164
      %p312 = pneg %p188
      %p313 = pneg %p185
      %p314 = pneg %p209
      %p315 = pneg %p206
      %p316 = pneg %p235
      %p317 = pneg %p232
      %p318 = scmp.lt.s32.totalorder %s20, 1
      %s319 = scalar_select %p318, %s20, 1
      %s320 = smul.addr %s319, 8
      %s321 = smul.addr %s320, 8
      %s322 = scalar_lea.vmem %s9, %s321
      %p323 = scmp.lt.s32.totalorder %s20, 1
      %s324 = scalar_select %p323, %s20, 1
      %s325 = smul.addr %s324, 2
      %s326 = smul.addr %s325, 8
      %s327 = scalar_lea.vmem %s0, %s326
      %p328 = scmp.lt.s32.totalorder %s20, 1
      %s329 = scalar_select %p328, %s20, 1
      %s330 = smul.addr %s329, 8
      %s331 = smul.addr %s330, 8
      %s332 = scalar_lea.vmem %s9, %s331
      %v333 = vld [vmem:[%s327] sm:$0xff]
      %v334 = vld [vmem:[%s327 + $0x8] sm:$0xff]
      %v335 = vld [vmem:[%s3] sm:$0xff]
      %v336 = vld [vmem:[%s3 + $0x8] sm:$0xff]
      %v337 = vld [vmem:[%s4] sm:$0xff]
      %v338 = vld [vmem:[%s4 + $0x8] sm:$0xff]
      %340 = vset.pattern.permute.xlu0 0
      %341 = vperm.xlu0 %340, %v337
      %v342 = vpop.permute.xlu0 %341
      %345 = vset.pattern.permute.xlu0 0
      %346 = vperm.xlu0 %345, %v338
      %v347 = vpop.permute.xlu0 %346
      %vm349 = vcmask 64512
      %v351 = vsel %vm349, %v335, 0
      %v354 = vsel %vm349, %v336, 0
      %356 = vmatprep.subr.mxu0 0.0
      %357 = vmatpush1.msra.mxu0 0.0
      %358 = vmatprep.subr.mxu0 0.0
      %359 = vmatpush1.msra.mxu0 0.0
      %360 = vmatprep.subr.mxu0 0.0
      %361 = vmatpush1.msra.mxu0 0.0
      %362 = vmatprep.subr.mxu0 0.0
      %363 = vmatpush1.msra.mxu0 0.0
      %364 = vmatprep.subr.mxu0 0.0
      %365 = vmatpush1.msra.mxu0 0.0
      %366 = vmatprep.subr.mxu0 0.0
      %367 = vmatpush1.msra.mxu0 0.0
      %368 = vmatprep.subr.mxu0 0.0
      %369 = vmatpush1.msra.mxu0 0.0
      %370 = vmatprep.subr.mxu0 0.0
      %371 = vmatpush1.msra.mxu0 0.0
      %372 = vmatprep.subr.mxu0 0.0
      %373 = vmatpush1.msra.mxu0 0.0
      %374 = vmatprep.subr.mxu0 0.0
      %375 = vmatpush1.msra.mxu0 0.0
      %376 = vmatprep.subr.mxu0 0.0
      %377 = vmatpush1.msra.mxu0 0.0
      %378 = vmatprep.subr.mxu0 0.0
      %379 = vmatpush1.msra.mxu0 0.0
      %380 = vmatprep.subr.mxu0 0.0
      %381 = vmatpush1.msra.mxu0 0.0
      %382 = vmatprep.subr.mxu0 0.0
      %383 = vmatpush1.msra.mxu0 0.0
      %384 = vmatprep.subr.mxu0 0.0
      %385 = vmatpush1.msra.mxu0 0.0
      %386 = vmatprep.subr.mxu0 %v334
      %387 = vmatpush1.msra.mxu0 %v333
      %388 = vmatprep.subr.mxu0 0.0
      %389 = vmatpush2.msra.mxu0 0.0
      %390 = vmatprep.subr.mxu0 0.0
      %391 = vmatpush2.msra.mxu0 0.0
      %392 = vmatprep.subr.mxu0 0.0
      %393 = vmatpush2.msra.mxu0 0.0
      %394 = vmatprep.subr.mxu0 0.0
      %395 = vmatpush2.msra.mxu0 0.0
      %396 = vmatprep.subr.mxu0 0.0
      %397 = vmatpush2.msra.mxu0 0.0
      %398 = vmatprep.subr.mxu0 0.0
      %399 = vmatpush2.msra.mxu0 0.0
      %400 = vmatprep.subr.mxu0 0.0
      %401 = vmatpush2.msra.mxu0 0.0
      %402 = vmatprep.subr.mxu0 0.0
      %403 = vmatpush2.msra.mxu0 0.0
      %404 = vmatprep.subr.mxu0 0.0
      %405 = vmatpush2.msra.mxu0 0.0
      %406 = vmatprep.subr.mxu0 0.0
      %407 = vmatpush2.msra.mxu0 0.0
      %408 = vmatprep.subr.mxu0 0.0
      %409 = vmatpush2.msra.mxu0 0.0
      %410 = vmatprep.subr.mxu0 0.0
      %411 = vmatpush2.msra.mxu0 0.0
      %412 = vmatprep.subr.mxu0 0.0
      %413 = vmatpush2.msra.mxu0 0.0
      %414 = vmatprep.subr.mxu0 0.0
      %415 = vmatpush2.msra.mxu0 0.0
      %416 = vmatprep.subr.mxu0 0.0
      %417 = vmatpush2.msra.mxu0 0.0
      %418 = vmatprep.subr.mxu0 0.0
      %419 = vmatpush2.msra.mxu0 0.0
      %420 = vmatprep.mubr.f32.mxu0 0.0
      %421 = vmatmul.mubr.f32.gmra.mxu0 %v351
      %v422 = vpop.f32.mrf.mxu0
      %v423 = vadd.f32 %v342, %v422
      %v424 = vpop.f32.mrf.mxu0
      %v425 = vadd.f32 %v342, %v424
      %426 = vmatprep.mubr.f32.mxu0 0.0
      %427 = vmatmul.mubr.f32.gmra.mxu0 %v354
      %v428 = vpop.f32.mrf.mxu0
      %v429 = vadd.f32 %v347, %v428
      %v430 = vpop.f32.mrf.mxu0
      %v431 = vadd.f32 %v347, %v430
      %432 = vdwg.mxu0
      %433 = vst [vmem:[%s332] sm:$0xff] %v423
      %434 = vst [vmem:[%s332 + $0x8] sm:$0xff] %v425
      %435 = vst [vmem:[#allocation2] sm:$0xff] %v429
      %436 = vst [vmem:[#allocation2 + $0x8] sm:$0xff] %v431
      %v437 = vld [vmem:[%s1] ss:$8 sm:$0x3]
      %v438 = vld [vmem:[#allocation2] sm:$0xff]
      %v439 = vld [vmem:[#allocation2 + $0x8] sm:$0xff]
      %440 = vrot.lane.b32.xlu0 %v438, 17
      %v441 = vpop.permute.xlu0 %440
      %442 = vrot.lane.b32.xlu0 %v439, 17
      %v443 = vpop.permute.xlu0 %442
      %v444 = vlaneseq
      %v445 = vand.u32 %v444, 127
      %vm446 = vcmp.lt.s32.totalorder %v445, 17
      %v447 = vsel %vm446, %v441, %v443
      %v448 = vsel %vm446, %v443, %v441
      %v450 = vlaneseq
      %v451 = vshrl.u32 %v450, 7
      %v452 = vsub.s32 0, %v451
      %v453 = vrot.slane %v437, %v452
      %v454 = vlaneseq
      %v455 = vshrl.u32 %v454, 7
      %v456 = vsub.s32 1, %v455
      %v457 = vrot.slane %v437, %v456
      %v460 = vmul.f32 %v448, %v453
      %v461 = vmul.f32 %v447, %v457
      %462 = vst [vmem:[#allocation3] sm:$0xff] %v460
      %463 = vst [vmem:[#allocation3 + $0x8] sm:$0xff] %v461
      %464 = vrot.lane.b32.xlu0 %v333, 17
      %v465 = vpop.permute.xlu0 %464
      %466 = vrot.lane.b32.xlu0 %v334, 17
      %v467 = vpop.permute.xlu0 %466
      %v468 = vsel %vm446, %v465, %v467
      %v469 = vsel %vm446, %v467, %v465
      %v470 = vld [vmem:[%s2] ss:$8 sm:$0x3]
      %v472 = vlaneseq
      %v473 = vshrl.u32 %v472, 7
      %v474 = vsub.s32 0, %v473
      %v475 = vrot.slane %v470, %v474
      %v476 = vlaneseq
      %v477 = vshrl.u32 %v476, 7
      %v478 = vsub.s32 1, %v477
      %v479 = vrot.slane %v470, %v478
      %v482 = vadd.f32 %v469, %v475
      %v483 = vadd.f32 %v468, %v479
      %484 = vst [vmem:[#allocation4] sm:$0xff] %v482
      %485 = vst [vmem:[#allocation4 + $0x8] sm:$0xff] %v483
      %s486 = scalar_lea.vmem %s1, 1
      %v487 = vld [vmem:[%s486] ss:$8 sm:$0x3]
      %v488 = vld [vmem:[#allocation2] sm:$0xff]
      %v489 = vld [vmem:[#allocation2 + $0x8] sm:$0xff]
      %490 = vrot.lane.b32.xlu0 %v488, 16
      %v491 = vpop.permute.xlu0 %490
      %492 = vrot.lane.b32.xlu0 %v489, 16
      %v493 = vpop.permute.xlu0 %492
      %vm494 = vcmp.lt.s32.totalorder %v445, 16
      %v495 = vsel %vm494, %v491, %v493
      %v496 = vsel %vm494, %v493, %v491
      %v498 = vlaneseq
      %v499 = vshrl.u32 %v498, 7
      %v500 = vsub.s32 0, %v499
      %v501 = vrot.slane %v487, %v500
      %v502 = vlaneseq
      %v503 = vshrl.u32 %v502, 7
      %v504 = vsub.s32 1, %v503
      %v505 = vrot.slane %v487, %v504
      %v508 = vmul.f32 %v496, %v501
      %v509 = vmul.f32 %v495, %v505
      %510 = vst [vmem:[#allocation3 + $0x10] sm:$0xff] %v508
      %511 = vst [vmem:[#allocation3 + $0x18] sm:$0xff] %v509
      %512 = vrot.lane.b32.xlu0 %v333, 16
      %v513 = vpop.permute.xlu0 %512
      %514 = vrot.lane.b32.xlu0 %v334, 16
      %v515 = vpop.permute.xlu0 %514
      %v516 = vsel %vm494, %v513, %v515
      %v517 = vsel %vm494, %v515, %v513
      %s518 = scalar_lea.vmem %s2, 1
      %v519 = vld [vmem:[%s518] ss:$8 sm:$0x3]
      %v521 = vlaneseq
      %v522 = vshrl.u32 %v521, 7
      %v523 = vsub.s32 0, %v522
      %v524 = vrot.slane %v519, %v523
      %v525 = vlaneseq
      %v526 = vshrl.u32 %v525, 7
      %v527 = vsub.s32 1, %v526
      %v528 = vrot.slane %v519, %v527
      %v531 = vadd.f32 %v517, %v524
      %v532 = vadd.f32 %v516, %v528
      %v533 = vld [vmem:[#allocation4] sm:$0xff]
      %v534 = vld [vmem:[#allocation4 + $0x8] sm:$0xff]
      %v535 = vmax.f32 %v533, %v531
      %v536 = vmax.f32 %v534, %v532
      %537 = vst [vmem:[#allocation4] sm:$0xff] %v535
      %538 = vst [vmem:[#allocation4 + $0x8] sm:$0xff] %v536
      %s539 = scalar_lea.vmem %s1, 2
      %v540 = vld [vmem:[%s539] ss:$8 sm:$0x3]
      %v541 = vld [vmem:[#allocation2] sm:$0xff]
      %v542 = vld [vmem:[#allocation2 + $0x8] sm:$0xff]
      %543 = vrot.lane.b32.xlu0 %v541, 15
      %v544 = vpop.permute.xlu0 %543
      %545 = vrot.lane.b32.xlu0 %v542, 15
      %v546 = vpop.permute.xlu0 %545
      %vm547 = vcmp.lt.s32.totalorder %v445, 15
      %v548 = vsel %vm547, %v544, %v546
      %v549 = vsel %vm547, %v546, %v544
      %v551 = vlaneseq
      %v552 = vshrl.u32 %v551, 7
      %v553 = vsub.s32 0, %v552
      %v554 = vrot.slane %v540, %v553
      %v555 = vlaneseq
      %v556 = vshrl.u32 %v555, 7
      %v557 = vsub.s32 1, %v556
      %v558 = vrot.slane %v540, %v557
      %v561 = vmul.f32 %v549, %v554
      %v562 = vmul.f32 %v548, %v558
      %563 = vst [vmem:[#allocation3 + $0x20] sm:$0xff] %v561
      %564 = vst [vmem:[#allocation3 + $0x28] sm:$0xff] %v562
      %565 = vrot.lane.b32.xlu0 %v333, 15
      %v566 = vpop.permute.xlu0 %565
      %567 = vrot.lane.b32.xlu0 %v334, 15
      %v568 = vpop.permute.xlu0 %567
      %v569 = vsel %vm547, %v566, %v568
      %v570 = vsel %vm547, %v568, %v566
      %s571 = scalar_lea.vmem %s2, 2
      %v572 = vld [vmem:[%s571] ss:$8 sm:$0x3]
      %v574 = vlaneseq
      %v575 = vshrl.u32 %v574, 7
      %v576 = vsub.s32 0, %v575
      %v577 = vrot.slane %v572, %v576
      %v578 = vlaneseq
      %v579 = vshrl.u32 %v578, 7
      %v580 = vsub.s32 1, %v579
      %v581 = vrot.slane %v572, %v580
      %v584 = vadd.f32 %v570, %v577
      %v585 = vadd.f32 %v569, %v581
      %v586 = vld [vmem:[#allocation4] sm:$0xff]
      %v587 = vld [vmem:[#allocation4 + $0x8] sm:$0xff]
      %v588 = vmax.f32 %v586, %v584
      %v589 = vmax.f32 %v587, %v585
      %590 = vst [vmem:[#allocation4] sm:$0xff] %v588
      %591 = vst [vmem:[#allocation4 + $0x8] sm:$0xff] %v589
      %s592 = scalar_lea.vmem %s1, 3
      %v593 = vld [vmem:[%s592] ss:$8 sm:$0x3]
      %v594 = vld [vmem:[#allocation2] sm:$0xff]
      %v595 = vld [vmem:[#allocation2 + $0x8] sm:$0xff]
      %596 = vrot.lane.b32.xlu0 %v594, 1
      %v597 = vpop.permute.xlu0 %596
      %598 = vrot.lane.b32.xlu0 %v595, 1
      %v599 = vpop.permute.xlu0 %598
      %vm600 = vcmp.lt.s32.totalorder %v445, 1
      %v601 = vsel %vm600, %v597, %v599
      %v602 = vsel %vm600, %v599, %v597
      %v604 = vlaneseq
      %v605 = vshrl.u32 %v604, 7
      %v606 = vsub.s32 0, %v605
      %v607 = vrot.slane %v593, %v606
      %v608 = vlaneseq
      %v609 = vshrl.u32 %v608, 7
      %v610 = vsub.s32 1, %v609
      %v611 = vrot.slane %v593, %v610
      %v614 = vmul.f32 %v602, %v607
      %v615 = vmul.f32 %v601, %v611
      %616 = vst [vmem:[#allocation3 + $0x30] sm:$0xff] %v614
      %617 = vst [vmem:[#allocation3 + $0x38] sm:$0xff] %v615
      %618 = vrot.lane.b32.xlu0 %v333, 1
      %v619 = vpop.permute.xlu0 %618
      %620 = vrot.lane.b32.xlu0 %v334, 1
      %v621 = vpop.permute.xlu0 %620
      %v622 = vsel %vm600, %v619, %v621
      %v623 = vsel %vm600, %v621, %v619
      %s624 = scalar_lea.vmem %s2, 3
      %v625 = vld [vmem:[%s624] ss:$8 sm:$0x3]
      %v627 = vlaneseq
      %v628 = vshrl.u32 %v627, 7
      %v629 = vsub.s32 0, %v628
      %v630 = vrot.slane %v625, %v629
      %v631 = vlaneseq
      %v632 = vshrl.u32 %v631, 7
      %v633 = vsub.s32 1, %v632
      %v634 = vrot.slane %v625, %v633
      %v637 = vadd.f32 %v623, %v630
      %v638 = vadd.f32 %v622, %v634
      %v639 = vld [vmem:[#allocation4] sm:$0xff]
      %v640 = vld [vmem:[#allocation4 + $0x8] sm:$0xff]
      %v641 = vmax.f32 %v639, %v637
      %v642 = vmax.f32 %v640, %v638
      %643 = vst [vmem:[#allocation4] sm:$0xff] %v641
      %644 = vst [vmem:[#allocation4 + $0x8] sm:$0xff] %v642
      %s645 = scalar_lea.vmem %s1, 4
      %v646 = vld [vmem:[%s645] ss:$8 sm:$0x3]
      %v647 = vld [vmem:[#allocation2] sm:$0xff]
      %v648 = vld [vmem:[#allocation2 + $0x8] sm:$0xff]
      %v650 = vlaneseq
      %v651 = vshrl.u32 %v650, 7
      %v652 = vsub.s32 0, %v651
      %v653 = vrot.slane %v646, %v652
      %v654 = vlaneseq
      %v655 = vshrl.u32 %v654, 7
      %v656 = vsub.s32 1, %v655
      %v657 = vrot.slane %v646, %v656
      %v660 = vmul.f32 %v647, %v653
      %v661 = vmul.f32 %v648, %v657
      %662 = vst [vmem:[#allocation3 + $0x40] sm:$0xff] %v660
      %663 = vst [vmem:[#allocation3 + $0x48] sm:$0xff] %v661
      %s664 = scalar_lea.vmem %s2, 4
      %v665 = vld [vmem:[%s664] ss:$8 sm:$0x3]
      %v667 = vlaneseq
      %v668 = vshrl.u32 %v667, 7
      %v669 = vsub.s32 0, %v668
      %v670 = vrot.slane %v665, %v669
      %v671 = vlaneseq
      %v672 = vshrl.u32 %v671, 7
      %v673 = vsub.s32 1, %v672
      %v674 = vrot.slane %v665, %v673
      %v677 = vadd.f32 %v333, %v670
      %v678 = vadd.f32 %v334, %v674
      %v679 = vld [vmem:[#allocation4] sm:$0xff]
      %v680 = vld [vmem:[#allocation4 + $0x8] sm:$0xff]
      %v681 = vmax.f32 %v679, %v677
      %v682 = vmax.f32 %v680, %v678
      %683 = vst [vmem:[#allocation4] sm:$0xff] %v681
      %684 = vst [vmem:[#allocation4 + $0x8] sm:$0xff] %v682
      %s685 = scalar_lea.vmem %s1, 5
      %v686 = vld [vmem:[%s685] ss:$8 sm:$0x3]
      %v687 = vld [vmem:[#allocation2] sm:$0xff]
      %v688 = vld [vmem:[#allocation2 + $0x8] sm:$0xff]
      %689 = vrot.lane.b32.xlu0 %v687, 127
      %v690 = vpop.permute.xlu0 %689
      %691 = vrot.lane.b32.xlu0 %v688, 127
      %v692 = vpop.permute.xlu0 %691
      %vm693 = vcmp.lt.s32.totalorder %v445, 127
      %v694 = vsel %vm693, %v690, %v692
      %v695 = vsel %vm693, %v692, %v690
      %v697 = vlaneseq
      %v698 = vshrl.u32 %v697, 7
      %v699 = vsub.s32 0, %v698
      %v700 = vrot.slane %v686, %v699
      %v701 = vlaneseq
      %v702 = vshrl.u32 %v701, 7
      %v703 = vsub.s32 1, %v702
      %v704 = vrot.slane %v686, %v703
      %v707 = vmul.f32 %v694, %v700
      %v708 = vmul.f32 %v695, %v704
      %709 = vst [vmem:[#allocation3 + $0x50] sm:$0xff] %v707
      %710 = vst [vmem:[#allocation3 + $0x58] sm:$0xff] %v708
      %711 = vrot.lane.b32.xlu0 %v333, 127
      %v712 = vpop.permute.xlu0 %711
      %713 = vrot.lane.b32.xlu0 %v334, 127
      %v714 = vpop.permute.xlu0 %713
      %v715 = vsel %vm693, %v712, %v714
      %v716 = vsel %vm693, %v714, %v712
      %s717 = scalar_lea.vmem %s2, 5
      %v718 = vld [vmem:[%s717] ss:$8 sm:$0x3]
      %v720 = vlaneseq
      %v721 = vshrl.u32 %v720, 7
      %v722 = vsub.s32 0, %v721
      %v723 = vrot.slane %v718, %v722
      %v724 = vlaneseq
      %v725 = vshrl.u32 %v724, 7
      %v726 = vsub.s32 1, %v725
      %v727 = vrot.slane %v718, %v726
      %v730 = vadd.f32 %v715, %v723
      %v731 = vadd.f32 %v716, %v727
      %v732 = vld [vmem:[#allocation4] sm:$0xff]
      %v733 = vld [vmem:[#allocation4 + $0x8] sm:$0xff]
      %v734 = vmax.f32 %v732, %v730
      %v735 = vmax.f32 %v733, %v731
      %736 = vst [vmem:[#allocation4] sm:$0xff] %v734
      %737 = vst [vmem:[#allocation4 + $0x8] sm:$0xff] %v735
      %s738 = scalar_lea.vmem %s1, 6
      %v739 = vld [vmem:[%s738] ss:$8 sm:$0x3]
      %v740 = vld [vmem:[#allocation2] sm:$0xff]
      %v741 = vld [vmem:[#allocation2 + $0x8] sm:$0xff]
      %742 = vrot.lane.b32.xlu0 %v740, 113
      %v743 = vpop.permute.xlu0 %742
      %744 = vrot.lane.b32.xlu0 %v741, 113
      %v745 = vpop.permute.xlu0 %744
      %vm746 = vcmp.lt.s32.totalorder %v445, 113
      %v747 = vsel %vm746, %v743, %v745
      %v748 = vsel %vm746, %v745, %v743
      %v750 = vlaneseq
      %v751 = vshrl.u32 %v750, 7
      %v752 = vsub.s32 0, %v751
      %v753 = vrot.slane %v739, %v752
      %v754 = vlaneseq
      %v755 = vshrl.u32 %v754, 7
      %v756 = vsub.s32 1, %v755
      %v757 = vrot.slane %v739, %v756
      %v760 = vmul.f32 %v747, %v753
      %v761 = vmul.f32 %v748, %v757
      %762 = vst [vmem:[#allocation3 + $0x60] sm:$0xff] %v760
      %763 = vst [vmem:[#allocation3 + $0x68] sm:$0xff] %v761
      %764 = vrot.lane.b32.xlu0 %v333, 113
      %v765 = vpop.permute.xlu0 %764
      %766 = vrot.lane.b32.xlu0 %v334, 113
      %v767 = vpop.permute.xlu0 %766
      %v768 = vsel %vm746, %v765, %v767
      %v769 = vsel %vm746, %v767, %v765
      %s770 = scalar_lea.vmem %s2, 6
      %v771 = vld [vmem:[%s770] ss:$8 sm:$0x3]
      %v773 = vlaneseq
      %v774 = vshrl.u32 %v773, 7
      %v775 = vsub.s32 0, %v774
      %v776 = vrot.slane %v771, %v775
      %v777 = vlaneseq
      %v778 = vshrl.u32 %v777, 7
      %v779 = vsub.s32 1, %v778
      %v780 = vrot.slane %v771, %v779
      %v783 = vadd.f32 %v768, %v776
      %v784 = vadd.f32 %v769, %v780
      %v785 = vld [vmem:[#allocation4] sm:$0xff]
      %v786 = vld [vmem:[#allocation4 + $0x8] sm:$0xff]
      %v787 = vmax.f32 %v785, %v783
      %v788 = vmax.f32 %v786, %v784
      %789 = vst [vmem:[#allocation4] sm:$0xff] %v787
      %790 = vst [vmem:[#allocation4 + $0x8] sm:$0xff] %v788
      %s791 = scalar_lea.vmem %s1, 7
      %v792 = vld [vmem:[%s791] ss:$8 sm:$0x3]
      %v793 = vld [vmem:[#allocation2] sm:$0xff]
      %v794 = vld [vmem:[#allocation2 + $0x8] sm:$0xff]
      %795 = vrot.lane.b32.xlu0 %v793, 112
      %v796 = vpop.permute.xlu0 %795
      %797 = vrot.lane.b32.xlu0 %v794, 112
      %v798 = vpop.permute.xlu0 %797
      %vm799 = vcmp.lt.s32.totalorder %v445, 112
      %v800 = vsel %vm799, %v796, %v798
      %v801 = vsel %vm799, %v798, %v796
      %v803 = vlaneseq
      %v804 = vshrl.u32 %v803, 7
      %v805 = vsub.s32 0, %v804
      %v806 = vrot.slane %v792, %v805
      %v807 = vlaneseq
      %v808 = vshrl.u32 %v807, 7
      %v809 = vsub.s32 1, %v808
      %v810 = vrot.slane %v792, %v809
      %v813 = vmul.f32 %v800, %v806
      %v814 = vmul.f32 %v801, %v810
      %815 = vst [vmem:[#allocation3 + $0x70] sm:$0xff] %v813
      %816 = vst [vmem:[#allocation3 + $0x78] sm:$0xff] %v814
      %817 = vrot.lane.b32.xlu0 %v333, 112
      %v818 = vpop.permute.xlu0 %817
      %819 = vrot.lane.b32.xlu0 %v334, 112
      %v820 = vpop.permute.xlu0 %819
      %v821 = vsel %vm799, %v818, %v820
      %v822 = vsel %vm799, %v820, %v818
      %s823 = scalar_lea.vmem %s2, 7
      %v824 = vld [vmem:[%s823] ss:$8 sm:$0x3]
      %v826 = vlaneseq
      %v827 = vshrl.u32 %v826, 7
      %v828 = vsub.s32 0, %v827
      %v829 = vrot.slane %v824, %v828
      %v830 = vlaneseq
      %v831 = vshrl.u32 %v830, 7
      %v832 = vsub.s32 1, %v831
      %v833 = vrot.slane %v824, %v832
      %v836 = vadd.f32 %v821, %v829
      %v837 = vadd.f32 %v822, %v833
      %v838 = vld [vmem:[#allocation4] sm:$0xff]
      %v839 = vld [vmem:[#allocation4 + $0x8] sm:$0xff]
      %v840 = vmax.f32 %v838, %v836
      %v841 = vmax.f32 %v839, %v837
      %842 = vst [vmem:[#allocation4] sm:$0xff] %v840
      %843 = vst [vmem:[#allocation4 + $0x8] sm:$0xff] %v841
      %s844 = scalar_lea.vmem %s1, 16
      %v845 = vld [vmem:[%s844] ss:$8 sm:$0x3]
      %v846 = vld [vmem:[#allocation2] sm:$0xff]
      %v847 = vld [vmem:[#allocation2 + $0x8] sm:$0xff]
      %848 = vrot.lane.b32.xlu0 %v846, 111
      %v849 = vpop.permute.xlu0 %848
      %850 = vrot.lane.b32.xlu0 %v847, 111
      %v851 = vpop.permute.xlu0 %850
      %vm852 = vcmp.lt.s32.totalorder %v445, 111
      %v853 = vsel %vm852, %v849, %v851
      %v854 = vsel %vm852, %v851, %v849
      %v856 = vlaneseq
      %v857 = vshrl.u32 %v856, 7
      %v858 = vsub.s32 0, %v857
      %v859 = vrot.slane %v845, %v858
      %v860 = vlaneseq
      %v861 = vshrl.u32 %v860, 7
      %v862 = vsub.s32 1, %v861
      %v863 = vrot.slane %v845, %v862
      %v866 = vmul.f32 %v853, %v859
      %v867 = vmul.f32 %v854, %v863
      %868 = vst [vmem:[#allocation3 + $0x80] sm:$0xff] %v866
      %869 = vst [vmem:[#allocation3 + $0x88] sm:$0xff] %v867
      %870 = vrot.lane.b32.xlu0 %v333, 111
      %v871 = vpop.permute.xlu0 %870
      %872 = vrot.lane.b32.xlu0 %v334, 111
      %v873 = vpop.permute.xlu0 %872
      %v874 = vsel %vm852, %v871, %v873
      %v875 = vsel %vm852, %v873, %v871
      %s876 = scalar_lea.vmem %s2, 16
      %v877 = vld [vmem:[%s876] ss:$8 sm:$0x3]
      %v879 = vlaneseq
      %v880 = vshrl.u32 %v879, 7
      %v881 = vsub.s32 0, %v880
      %v882 = vrot.slane %v877, %v881
      %v883 = vlaneseq
      %v884 = vshrl.u32 %v883, 7
      %v885 = vsub.s32 1, %v884
      %v886 = vrot.slane %v877, %v885
      %v889 = vadd.f32 %v874, %v882
      %v890 = vadd.f32 %v875, %v886
      %v891 = vld [vmem:[#allocation4] sm:$0xff]
      %v892 = vld [vmem:[#allocation4 + $0x8] sm:$0xff]
      %v893 = vmax.f32 %v891, %v889
      %v894 = vmax.f32 %v892, %v890
      %895 = vst [vmem:[#allocation4] sm:$0xff] %v893
      %896 = vst [vmem:[#allocation4 + $0x8] sm:$0xff] %v894
      %s897 = scalar_lea.vmem %s1, 17
      %v898 = vld [vmem:[%s897] ss:$8 sm:$0x3]
      %v899 = vld [vmem:[#allocation2] sm:$0xff]
      %v900 = vld [vmem:[#allocation2 + $0x8] sm:$0xff]
      %901 = vrot.lane.b32.xlu0 %v899, 34
      %v902 = vpop.permute.xlu0 %901
      %903 = vrot.lane.b32.xlu0 %v900, 34
      %v904 = vpop.permute.xlu0 %903
      %vm905 = vcmp.lt.s32.totalorder %v445, 34
      %v906 = vsel %vm905, %v902, %v904
      %v907 = vsel %vm905, %v904, %v902
      %v909 = vlaneseq
      %v910 = vshrl.u32 %v909, 7
      %v911 = vsub.s32 0, %v910
      %v912 = vrot.slane %v898, %v911
      %v913 = vlaneseq
      %v914 = vshrl.u32 %v913, 7
      %v915 = vsub.s32 1, %v914
      %v916 = vrot.slane %v898, %v915
      %v919 = vmul.f32 %v907, %v912
      %v920 = vmul.f32 %v906, %v916
      %921 = vst [vmem:[#allocation3 + $0x90] sm:$0xff] %v919
      %922 = vst [vmem:[#allocation3 + $0x98] sm:$0xff] %v920
      %s923 = scalar_lea.vmem %s1, 18
      %v924 = vld [vmem:[%s923] ss:$8 sm:$0x3]
      %v925 = vld [vmem:[#allocation2] sm:$0xff]
      %v926 = vld [vmem:[#allocation2 + $0x8] sm:$0xff]
      %927 = vrot.lane.b32.xlu0 %v925, 33
      %v928 = vpop.permute.xlu0 %927
      %929 = vrot.lane.b32.xlu0 %v926, 33
      %v930 = vpop.permute.xlu0 %929
      %vm931 = vcmp.lt.s32.totalorder %v445, 33
      %v932 = vsel %vm931, %v928, %v930
      %v933 = vsel %vm931, %v930, %v928
      %v935 = vlaneseq
      %v936 = vshrl.u32 %v935, 7
      %v937 = vsub.s32 0, %v936
      %v938 = vrot.slane %v924, %v937
      %v939 = vlaneseq
      %v940 = vshrl.u32 %v939, 7
      %v941 = vsub.s32 1, %v940
      %v942 = vrot.slane %v924, %v941
      %v945 = vmul.f32 %v933, %v938
      %v946 = vmul.f32 %v932, %v942
      %947 = vst [vmem:[#allocation3 + $0xa0] sm:$0xff] %v945
      %948 = vst [vmem:[#allocation3 + $0xa8] sm:$0xff] %v946
      %s949 = scalar_lea.vmem %s1, 19
      %v950 = vld [vmem:[%s949] ss:$8 sm:$0x3]
      %v951 = vld [vmem:[#allocation2] sm:$0xff]
      %v952 = vld [vmem:[#allocation2 + $0x8] sm:$0xff]
      %953 = vrot.lane.b32.xlu0 %v951, 32
      %v954 = vpop.permute.xlu0 %953
      %955 = vrot.lane.b32.xlu0 %v952, 32
      %v956 = vpop.permute.xlu0 %955
      %vm957 = vcmp.lt.s32.totalorder %v445, 32
      %v958 = vsel %vm957, %v954, %v956
      %v959 = vsel %vm957, %v956, %v954
      %v961 = vlaneseq
      %v962 = vshrl.u32 %v961, 7
      %v963 = vsub.s32 0, %v962
      %v964 = vrot.slane %v950, %v963
      %v965 = vlaneseq
      %v966 = vshrl.u32 %v965, 7
      %v967 = vsub.s32 1, %v966
      %v968 = vrot.slane %v950, %v967
      %v971 = vmul.f32 %v959, %v964
      %v972 = vmul.f32 %v958, %v968
      %973 = vst [vmem:[#allocation3 + $0xb0] sm:$0xff] %v971
      %974 = vst [vmem:[#allocation3 + $0xb8] sm:$0xff] %v972
      %s975 = scalar_lea.vmem %s1, 20
      %v976 = vld [vmem:[%s975] ss:$8 sm:$0x3]
      %v977 = vld [vmem:[#allocation2] sm:$0xff]
      %v978 = vld [vmem:[#allocation2 + $0x8] sm:$0xff]
      %979 = vrot.lane.b32.xlu0 %v977, 31
      %v980 = vpop.permute.xlu0 %979
      %981 = vrot.lane.b32.xlu0 %v978, 31
      %v982 = vpop.permute.xlu0 %981
      %vm983 = vcmp.lt.s32.totalorder %v445, 31
      %v984 = vsel %vm983, %v980, %v982
      %v985 = vsel %vm983, %v982, %v980
      %v987 = vlaneseq
      %v988 = vshrl.u32 %v987, 7
      %v989 = vsub.s32 0, %v988
      %v990 = vrot.slane %v976, %v989
      %v991 = vlaneseq
      %v992 = vshrl.u32 %v991, 7
      %v993 = vsub.s32 1, %v992
      %v994 = vrot.slane %v976, %v993
      %v997 = vmul.f32 %v985, %v990
      %v998 = vmul.f32 %v984, %v994
      %999 = vst [vmem:[#allocation3 + $0xc0] sm:$0xff] %v997
      %1000 = vst [vmem:[#allocation3 + $0xc8] sm:$0xff] %v998
      %s1001 = scalar_lea.vmem %s1, 21
      %v1002 = vld [vmem:[%s1001] ss:$8 sm:$0x3]
      %v1003 = vld [vmem:[#allocation2] sm:$0xff]
      %v1004 = vld [vmem:[#allocation2 + $0x8] sm:$0xff]
      %1005 = vrot.lane.b32.xlu0 %v1003, 30
      %v1006 = vpop.permute.xlu0 %1005
      %1007 = vrot.lane.b32.xlu0 %v1004, 30
      %v1008 = vpop.permute.xlu0 %1007
      %vm1009 = vcmp.lt.s32.totalorder %v445, 30
      %v1010 = vsel %vm1009, %v1006, %v1008
      %v1011 = vsel %vm1009, %v1008, %v1006
      %v1013 = vlaneseq
      %v1014 = vshrl.u32 %v1013, 7
      %v1015 = vsub.s32 0, %v1014
      %v1016 = vrot.slane %v1002, %v1015
      %v1017 = vlaneseq
      %v1018 = vshrl.u32 %v1017, 7
      %v1019 = vsub.s32 1, %v1018
      %v1020 = vrot.slane %v1002, %v1019
      %v1023 = vmul.f32 %v1011, %v1016
      %v1024 = vmul.f32 %v1010, %v1020
      %1025 = vst [vmem:[#allocation3 + $0xd0] sm:$0xff] %v1023
      %1026 = vst [vmem:[#allocation3 + $0xd8] sm:$0xff] %v1024
      %s1027 = scalar_lea.vmem %s1, 22
      %v1028 = vld [vmem:[%s1027] ss:$8 sm:$0x3]
      %v1029 = vld [vmem:[#allocation2] sm:$0xff]
      %v1030 = vld [vmem:[#allocation2 + $0x8] sm:$0xff]
      %1031 = vrot.lane.b32.xlu0 %v1029, 18
      %v1032 = vpop.permute.xlu0 %1031
      %1033 = vrot.lane.b32.xlu0 %v1030, 18
      %v1034 = vpop.permute.xlu0 %1033
      %vm1035 = vcmp.lt.s32.totalorder %v445, 18
      %v1036 = vsel %vm1035, %v1032, %v1034
      %v1037 = vsel %vm1035, %v1034, %v1032
      %v1039 = vlaneseq
      %v1040 = vshrl.u32 %v1039, 7
      %v1041 = vsub.s32 0, %v1040
      %v1042 = vrot.slane %v1028, %v1041
      %v1043 = vlaneseq
      %v1044 = vshrl.u32 %v1043, 7
      %v1045 = vsub.s32 1, %v1044
      %v1046 = vrot.slane %v1028, %v1045
      %v1049 = vmul.f32 %v1037, %v1042
      %v1050 = vmul.f32 %v1036, %v1046
      %1051 = vst [vmem:[#allocation3 + $0xe0] sm:$0xff] %v1049
      %1052 = vst [vmem:[#allocation3 + $0xe8] sm:$0xff] %v1050
      %s1053 = scalar_lea.vmem %s1, 23
      %v1054 = vld [vmem:[%s1053] ss:$8 sm:$0x3]
      %v1055 = vld [vmem:[#allocation2] sm:$0xff]
      %v1056 = vld [vmem:[#allocation2 + $0x8] sm:$0xff]
      %1057 = vrot.lane.b32.xlu0 %v1055, 14
      %v1058 = vpop.permute.xlu0 %1057
      %1059 = vrot.lane.b32.xlu0 %v1056, 14
      %v1060 = vpop.permute.xlu0 %1059
      %vm1061 = vcmp.lt.s32.totalorder %v445, 14
      %v1062 = vsel %vm1061, %v1058, %v1060
      %v1063 = vsel %vm1061, %v1060, %v1058
      %v1065 = vlaneseq
      %v1066 = vshrl.u32 %v1065, 7
      %v1067 = vsub.s32 0, %v1066
      %v1068 = vrot.slane %v1054, %v1067
      %v1069 = vlaneseq
      %v1070 = vshrl.u32 %v1069, 7
      %v1071 = vsub.s32 1, %v1070
      %v1072 = vrot.slane %v1054, %v1071
      %v1075 = vmul.f32 %v1063, %v1068
      %v1076 = vmul.f32 %v1062, %v1072
      %1077 = vst [vmem:[#allocation3 + $0xf0] sm:$0xff] %v1075
      %1078 = vst [vmem:[#allocation3 + $0xf8] sm:$0xff] %v1076
      %s1079 = scalar_lea.vmem %s1, 32
      %v1080 = vld [vmem:[%s1079] ss:$8 sm:$0x3]
      %v1081 = vld [vmem:[#allocation2] sm:$0xff]
      %v1082 = vld [vmem:[#allocation2 + $0x8] sm:$0xff]
      %1083 = vrot.lane.b32.xlu0 %v1081, 2
      %v1084 = vpop.permute.xlu0 %1083
      %1085 = vrot.lane.b32.xlu0 %v1082, 2
      %v1086 = vpop.permute.xlu0 %1085
      %vm1087 = vcmp.lt.s32.totalorder %v445, 2
      %v1088 = vsel %vm1087, %v1084, %v1086
      %v1089 = vsel %vm1087, %v1086, %v1084
      %v1091 = vlaneseq
      %v1092 = vshrl.u32 %v1091, 7
      %v1093 = vsub.s32 0, %v1092
      %v1094 = vrot.slane %v1080, %v1093
      %v1095 = vlaneseq
      %v1096 = vshrl.u32 %v1095, 7
      %v1097 = vsub.s32 1, %v1096
      %v1098 = vrot.slane %v1080, %v1097
      %v1101 = vmul.f32 %v1089, %v1094
      %v1102 = vmul.f32 %v1088, %v1098
      %1103 = vst [vmem:[#allocation3 + $0x100] sm:$0xff] %v1101
      %1104 = vst [vmem:[#allocation3 + $0x108] sm:$0xff] %v1102
      %s1105 = scalar_lea.vmem %s1, 33
      %v1106 = vld [vmem:[%s1105] ss:$8 sm:$0x3]
      %v1107 = vld [vmem:[#allocation2] sm:$0xff]
      %v1108 = vld [vmem:[#allocation2 + $0x8] sm:$0xff]
      %1109 = vrot.lane.b32.xlu0 %v1107, 126
      %v1110 = vpop.permute.xlu0 %1109
      %1111 = vrot.lane.b32.xlu0 %v1108, 126
      %v1112 = vpop.permute.xlu0 %1111
      %vm1113 = vcmp.lt.s32.totalorder %v445, 126
      %v1114 = vsel %vm1113, %v1110, %v1112
      %v1115 = vsel %vm1113, %v1112, %v1110
      %v1117 = vlaneseq
      %v1118 = vshrl.u32 %v1117, 7
      %v1119 = vsub.s32 0, %v1118
      %v1120 = vrot.slane %v1106, %v1119
      %v1121 = vlaneseq
      %v1122 = vshrl.u32 %v1121, 7
      %v1123 = vsub.s32 1, %v1122
      %v1124 = vrot.slane %v1106, %v1123
      %v1127 = vmul.f32 %v1114, %v1120
      %v1128 = vmul.f32 %v1115, %v1124
      %1129 = vst [vmem:[#allocation3 + $0x110] sm:$0xff] %v1127
      %1130 = vst [vmem:[#allocation3 + $0x118] sm:$0xff] %v1128
      %s1131 = scalar_lea.vmem %s1, 34
      %v1132 = vld [vmem:[%s1131] ss:$8 sm:$0x3]
      %v1133 = vld [vmem:[#allocation2] sm:$0xff]
      %v1134 = vld [vmem:[#allocation2 + $0x8] sm:$0xff]
      %1135 = vrot.lane.b32.xlu0 %v1133, 114
      %v1136 = vpop.permute.xlu0 %1135
      %1137 = vrot.lane.b32.xlu0 %v1134, 114
      %v1138 = vpop.permute.xlu0 %1137
      %vm1139 = vcmp.lt.s32.totalorder %v445, 114
      %v1140 = vsel %vm1139, %v1136, %v1138
      %v1141 = vsel %vm1139, %v1138, %v1136
      %v1143 = vlaneseq
      %v1144 = vshrl.u32 %v1143, 7
      %v1145 = vsub.s32 0, %v1144
      %v1146 = vrot.slane %v1132, %v1145
      %v1147 = vlaneseq
      %v1148 = vshrl.u32 %v1147, 7
      %v1149 = vsub.s32 1, %v1148
      %v1150 = vrot.slane %v1132, %v1149
      %v1153 = vmul.f32 %v1140, %v1146
      %v1154 = vmul.f32 %v1141, %v1150
      %1155 = vst [vmem:[#allocation3 + $0x120] sm:$0xff] %v1153
      %1156 = vst [vmem:[#allocation3 + $0x128] sm:$0xff] %v1154
      %s1157 = scalar_lea.vmem %s1, 35
      %v1158 = vld [vmem:[%s1157] ss:$8 sm:$0x3]
      %v1159 = vld [vmem:[#allocation2] sm:$0xff]
      %v1160 = vld [vmem:[#allocation2 + $0x8] sm:$0xff]
      %1161 = vrot.lane.b32.xlu0 %v1159, 110
      %v1162 = vpop.permute.xlu0 %1161
      %1163 = vrot.lane.b32.xlu0 %v1160, 110
      %v1164 = vpop.permute.xlu0 %1163
      %vm1165 = vcmp.lt.s32.totalorder %v445, 110
      %v1166 = vsel %vm1165, %v1162, %v1164
      %v1167 = vsel %vm1165, %v1164, %v1162
      %v1169 = vlaneseq
      %v1170 = vshrl.u32 %v1169, 7
      %v1171 = vsub.s32 0, %v1170
      %v1172 = vrot.slane %v1158, %v1171
      %v1173 = vlaneseq
      %v1174 = vshrl.u32 %v1173, 7
      %v1175 = vsub.s32 1, %v1174
      %v1176 = vrot.slane %v1158, %v1175
      %v1179 = vmul.f32 %v1166, %v1172
      %v1180 = vmul.f32 %v1167, %v1176
      %1181 = vst [vmem:[#allocation3 + $0x130] sm:$0xff] %v1179
      %1182 = vst [vmem:[#allocation3 + $0x138] sm:$0xff] %v1180
      %s1183 = scalar_lea.vmem %s1, 36
      %v1184 = vld [vmem:[%s1183] ss:$8 sm:$0x3]
      %v1185 = vld [vmem:[#allocation2] sm:$0xff]
      %v1186 = vld [vmem:[#allocation2 + $0x8] sm:$0xff]
      %1187 = vrot.lane.b32.xlu0 %v1185, 98
      %v1188 = vpop.permute.xlu0 %1187
      %1189 = vrot.lane.b32.xlu0 %v1186, 98
      %v1190 = vpop.permute.xlu0 %1189
      %vm1191 = vcmp.lt.s32.totalorder %v445, 98
      %v1192 = vsel %vm1191, %v1188, %v1190
      %v1193 = vsel %vm1191, %v1190, %v1188
      %v1195 = vlaneseq
      %v1196 = vshrl.u32 %v1195, 7
      %v1197 = vsub.s32 0, %v1196
      %v1198 = vrot.slane %v1184, %v1197
      %v1199 = vlaneseq
      %v1200 = vshrl.u32 %v1199, 7
      %v1201 = vsub.s32 1, %v1200
      %v1202 = vrot.slane %v1184, %v1201
      %v1205 = vmul.f32 %v1192, %v1198
      %v1206 = vmul.f32 %v1193, %v1202
      %1207 = vst [vmem:[#allocation3 + $0x140] sm:$0xff] %v1205
      %1208 = vst [vmem:[#allocation3 + $0x148] sm:$0xff] %v1206
      %s1209 = scalar_lea.vmem %s1, 37
      %v1210 = vld [vmem:[%s1209] ss:$8 sm:$0x3]
      %v1211 = vld [vmem:[#allocation2] sm:$0xff]
      %v1212 = vld [vmem:[#allocation2 + $0x8] sm:$0xff]
      %1213 = vrot.lane.b32.xlu0 %v1211, 97
      %v1214 = vpop.permute.xlu0 %1213
      %1215 = vrot.lane.b32.xlu0 %v1212, 97
      %v1216 = vpop.permute.xlu0 %1215
      %vm1217 = vcmp.lt.s32.totalorder %v445, 97
      %v1218 = vsel %vm1217, %v1214, %v1216
      %v1219 = vsel %vm1217, %v1216, %v1214
      %v1221 = vlaneseq
      %v1222 = vshrl.u32 %v1221, 7
      %v1223 = vsub.s32 0, %v1222
      %v1224 = vrot.slane %v1210, %v1223
      %v1225 = vlaneseq
      %v1226 = vshrl.u32 %v1225, 7
      %v1227 = vsub.s32 1, %v1226
      %v1228 = vrot.slane %v1210, %v1227
      %v1231 = vmul.f32 %v1218, %v1224
      %v1232 = vmul.f32 %v1219, %v1228
      %1233 = vst [vmem:[#allocation3 + $0x150] sm:$0xff] %v1231
      %1234 = vst [vmem:[#allocation3 + $0x158] sm:$0xff] %v1232
      %s1235 = scalar_lea.vmem %s1, 38
      %v1236 = vld [vmem:[%s1235] ss:$8 sm:$0x3]
      %v1237 = vld [vmem:[#allocation2] sm:$0xff]
      %v1238 = vld [vmem:[#allocation2 + $0x8] sm:$0xff]
      %1239 = vrot.lane.b32.xlu0 %v1237, 96
      %v1240 = vpop.permute.xlu0 %1239
      %1241 = vrot.lane.b32.xlu0 %v1238, 96
      %v1242 = vpop.permute.xlu0 %1241
      %vm1243 = vcmp.lt.s32.totalorder %v445, 96
      %v1244 = vsel %vm1243, %v1240, %v1242
      %v1245 = vsel %vm1243, %v1242, %v1240
      %v1247 = vlaneseq
      %v1248 = vshrl.u32 %v1247, 7
      %v1249 = vsub.s32 0, %v1248
      %v1250 = vrot.slane %v1236, %v1249
      %v1251 = vlaneseq
      %v1252 = vshrl.u32 %v1251, 7
      %v1253 = vsub.s32 1, %v1252
      %v1254 = vrot.slane %v1236, %v1253
      %v1257 = vmul.f32 %v1244, %v1250
      %v1258 = vmul.f32 %v1245, %v1254
      %1259 = vst [vmem:[#allocation3 + $0x160] sm:$0xff] %v1257
      %1260 = vst [vmem:[#allocation3 + $0x168] sm:$0xff] %v1258
      %s1261 = scalar_lea.vmem %s1, 39
      %v1262 = vld [vmem:[%s1261] ss:$8 sm:$0x3]
      %v1263 = vld [vmem:[#allocation2] sm:$0xff]
      %v1264 = vld [vmem:[#allocation2 + $0x8] sm:$0xff]
      %1265 = vrot.lane.b32.xlu0 %v1263, 95
      %v1266 = vpop.permute.xlu0 %1265
      %1267 = vrot.lane.b32.xlu0 %v1264, 95
      %v1268 = vpop.permute.xlu0 %1267
      %vm1269 = vcmp.lt.s32.totalorder %v445, 95
      %v1270 = vsel %vm1269, %v1266, %v1268
      %v1271 = vsel %vm1269, %v1268, %v1266
      %v1273 = vlaneseq
      %v1274 = vshrl.u32 %v1273, 7
      %v1275 = vsub.s32 0, %v1274
      %v1276 = vrot.slane %v1262, %v1275
      %v1277 = vlaneseq
      %v1278 = vshrl.u32 %v1277, 7
      %v1279 = vsub.s32 1, %v1278
      %v1280 = vrot.slane %v1262, %v1279
      %v1283 = vmul.f32 %v1270, %v1276
      %v1284 = vmul.f32 %v1271, %v1280
      %1285 = vst [vmem:[#allocation3 + $0x170] sm:$0xff] %v1283
      %1286 = vst [vmem:[#allocation3 + $0x178] sm:$0xff] %v1284
      %s1287 = scalar_lea.vmem %s1, 48
      %v1288 = vld [vmem:[%s1287] ss:$8 sm:$0x3]
      %v1289 = vld [vmem:[#allocation2] sm:$0xff]
      %v1290 = vld [vmem:[#allocation2 + $0x8] sm:$0xff]
      %1291 = vrot.lane.b32.xlu0 %v1289, 94
      %v1292 = vpop.permute.xlu0 %1291
      %1293 = vrot.lane.b32.xlu0 %v1290, 94
      %v1294 = vpop.permute.xlu0 %1293
      %vm1295 = vcmp.lt.s32.totalorder %v445, 94
      %v1296 = vsel %vm1295, %v1292, %v1294
      %v1297 = vsel %vm1295, %v1294, %v1292
      %v1299 = vlaneseq
      %v1300 = vshrl.u32 %v1299, 7
      %v1301 = vsub.s32 0, %v1300
      %v1302 = vrot.slane %v1288, %v1301
      %v1303 = vlaneseq
      %v1304 = vshrl.u32 %v1303, 7
      %v1305 = vsub.s32 1, %v1304
      %v1306 = vrot.slane %v1288, %v1305
      %v1309 = vmul.f32 %v1296, %v1302
      %v1310 = vmul.f32 %v1297, %v1306
      %1311 = vst [vmem:[#allocation3 + $0x180] sm:$0xff] %v1309
      %1312 = vst [vmem:[#allocation3 + $0x188] sm:$0xff] %v1310
      %v1313 = vld [vmem:[%s5] sm:$0xff]
      %v1314 = vld [vmem:[%s5 + $0x8] sm:$0xff]
      %v1315 = vld [vmem:[%s5 + $0x10] sm:$0xff]
      %v1316 = vld [vmem:[%s5 + $0x18] sm:$0xff]
      %v1317 = vld [vmem:[#allocation3] sm:$0xff]
      %v1318 = vld [vmem:[#allocation3 + $0x8] sm:$0xff]
      %v1319 = vld [vmem:[#allocation3 + $0x10] sm:$0xff]
      %v1320 = vld [vmem:[#allocation3 + $0x18] sm:$0xff]
      %v1321 = vld [vmem:[#allocation3 + $0x20] sm:$0xff]
      %v1322 = vld [vmem:[#allocation3 + $0x28] sm:$0xff]
      %v1323 = vld [vmem:[#allocation3 + $0x30] sm:$0xff]
      %v1324 = vld [vmem:[#allocation3 + $0x38] sm:$0xff]
      %v1325 = vld [vmem:[#allocation3 + $0x40] sm:$0xff]
      %v1326 = vld [vmem:[#allocation3 + $0x48] sm:$0xff]
      %v1327 = vld [vmem:[#allocation3 + $0x50] sm:$0xff]
      %v1328 = vld [vmem:[#allocation3 + $0x58] sm:$0xff]
      %v1329 = vld [vmem:[#allocation3 + $0x60] sm:$0xff]
      %v1330 = vld [vmem:[#allocation3 + $0x68] sm:$0xff]
      %v1331 = vld [vmem:[#allocation3 + $0x70] sm:$0xff]
      %v1332 = vld [vmem:[#allocation3 + $0x78] sm:$0xff]
      %v1333 = vld [vmem:[#allocation3 + $0x80] sm:$0xff]
      %v1334 = vld [vmem:[#allocation3 + $0x88] sm:$0xff]
      %v1335 = vld [vmem:[#allocation3 + $0x90] sm:$0xff]
      %v1336 = vld [vmem:[#allocation3 + $0x98] sm:$0xff]
      %v1337 = vld [vmem:[#allocation3 + $0xa0] sm:$0xff]
      %v1338 = vld [vmem:[#allocation3 + $0xa8] sm:$0xff]
      %v1339 = vld [vmem:[#allocation3 + $0xb0] sm:$0xff]
      %v1340 = vld [vmem:[#allocation3 + $0xb8] sm:$0xff]
      %v1341 = vld [vmem:[#allocation3 + $0xc0] sm:$0xff]
      %v1342 = vld [vmem:[#allocation3 + $0xc8] sm:$0xff]
      %v1343 = vld [vmem:[#allocation3 + $0xd0] sm:$0xff]
      %v1344 = vld [vmem:[#allocation3 + $0xd8] sm:$0xff]
      %v1345 = vld [vmem:[#allocation3 + $0xe0] sm:$0xff]
      %v1346 = vld [vmem:[#allocation3 + $0xe8] sm:$0xff]
      %v1347 = vld [vmem:[#allocation3 + $0xf0] sm:$0xff]
      %v1348 = vld [vmem:[#allocation3 + $0xf8] sm:$0xff]
      %v1349 = vld [vmem:[#allocation3 + $0x100] sm:$0xff]
      %v1350 = vld [vmem:[#allocation3 + $0x108] sm:$0xff]
      %v1351 = vld [vmem:[#allocation3 + $0x110] sm:$0xff]
      %v1352 = vld [vmem:[#allocation3 + $0x118] sm:$0xff]
      %v1353 = vld [vmem:[#allocation3 + $0x120] sm:$0xff]
      %v1354 = vld [vmem:[#allocation3 + $0x128] sm:$0xff]
      %v1355 = vld [vmem:[#allocation3 + $0x130] sm:$0xff]
      %v1356 = vld [vmem:[#allocation3 + $0x138] sm:$0xff]
      %v1357 = vld [vmem:[#allocation3 + $0x140] sm:$0xff]
      %v1358 = vld [vmem:[#allocation3 + $0x148] sm:$0xff]
      %v1359 = vld [vmem:[#allocation3 + $0x150] sm:$0xff]
      %v1360 = vld [vmem:[#allocation3 + $0x158] sm:$0xff]
      %v1361 = vld [vmem:[#allocation3 + $0x160] sm:$0xff]
      %v1362 = vld [vmem:[#allocation3 + $0x168] sm:$0xff]
      %v1363 = vld [vmem:[#allocation3 + $0x170] sm:$0xff]
      %v1364 = vld [vmem:[#allocation3 + $0x178] sm:$0xff]
      %v1365 = vld [vmem:[#allocation3 + $0x180] sm:$0xff]
      %v1366 = vld [vmem:[#allocation3 + $0x188] sm:$0xff]
      %v1367 = vld [vmem:[%s6] sm:$0xff]
      %v1368 = vld [vmem:[%s6 + $0x8] sm:$0xff]
      %1370 = vset.pattern.permute.xlu0 0
      %1371 = vperm.xlu0 %1370, %v1367
      %v1372 = vpop.permute.xlu0 %1371
      %1375 = vset.pattern.permute.xlu0 0
      %1376 = vperm.xlu0 %1375, %v1368
      %v1377 = vpop.permute.xlu0 %1376
      %vm1379 = vcmask 588800
      %v1381 = vsel %vm1379, %v1314, 0
      %v1384 = vsel %vm1379, %v1316, 0
      %1386 = vmatprep.subr.mxu0 %v1348
      %1387 = vmatpush1.msra.mxu0 %v1347
      %1388 = vmatprep.subr.mxu0 %v1346
      %1389 = vmatpush1.msra.mxu0 %v1345
      %1390 = vmatprep.subr.mxu0 %v1344
      %1391 = vmatpush1.msra.mxu0 %v1343
      %1392 = vmatprep.subr.mxu0 %v1342
      %1393 = vmatpush1.msra.mxu0 %v1341
      %1394 = vmatprep.subr.mxu0 %v1340
      %1395 = vmatpush1.msra.mxu0 %v1339
      %1396 = vmatprep.subr.mxu0 %v1338
      %1397 = vmatpush1.msra.mxu0 %v1337
      %1398 = vmatprep.subr.mxu0 %v1336
      %1399 = vmatpush1.msra.mxu0 %v1335
      %1400 = vmatprep.subr.mxu0 %v1334
      %1401 = vmatpush1.msra.mxu0 %v1333
      %1402 = vmatprep.subr.mxu0 %v1332
      %1403 = vmatpush1.msra.mxu0 %v1331
      %1404 = vmatprep.subr.mxu0 %v1330
      %1405 = vmatpush1.msra.mxu0 %v1329
      %1406 = vmatprep.subr.mxu0 %v1328
      %1407 = vmatpush1.msra.mxu0 %v1327
      %1408 = vmatprep.subr.mxu0 %v1326
      %1409 = vmatpush1.msra.mxu0 %v1325
      %1410 = vmatprep.subr.mxu0 %v1324
      %1411 = vmatpush1.msra.mxu0 %v1323
      %1412 = vmatprep.subr.mxu0 %v1322
      %1413 = vmatpush1.msra.mxu0 %v1321
      %1414 = vmatprep.subr.mxu0 %v1320
      %1415 = vmatpush1.msra.mxu0 %v1319
      %1416 = vmatprep.subr.mxu0 %v1318
      %1417 = vmatpush1.msra.mxu0 %v1317
      %1418 = vmatprep.subr.mxu0 0.0
      %1419 = vmatpush2.msra.mxu0 0.0
      %1420 = vmatprep.subr.mxu0 0.0
      %1421 = vmatpush2.msra.mxu0 0.0
      %1422 = vmatprep.subr.mxu0 0.0
      %1423 = vmatpush2.msra.mxu0 0.0
      %1424 = vmatprep.subr.mxu0 0.0
      %1425 = vmatpush2.msra.mxu0 0.0
      %1426 = vmatprep.subr.mxu0 0.0
      %1427 = vmatpush2.msra.mxu0 0.0
      %1428 = vmatprep.subr.mxu0 0.0
      %1429 = vmatpush2.msra.mxu0 0.0
      %1430 = vmatprep.subr.mxu0 0.0
      %1431 = vmatpush2.msra.mxu0 0.0
      %1432 = vmatprep.subr.mxu0 %v1366
      %1433 = vmatpush2.msra.mxu0 %v1365
      %1434 = vmatprep.subr.mxu0 %v1364
      %1435 = vmatpush2.msra.mxu0 %v1363
      %1436 = vmatprep.subr.mxu0 %v1362
      %1437 = vmatpush2.msra.mxu0 %v1361
      %1438 = vmatprep.subr.mxu0 %v1360
      %1439 = vmatpush2.msra.mxu0 %v1359
      %1440 = vmatprep.subr.mxu0 %v1358
      %1441 = vmatpush2.msra.mxu0 %v1357
      %1442 = vmatprep.subr.mxu0 %v1356
      %1443 = vmatpush2.msra.mxu0 %v1355
      %1444 = vmatprep.subr.mxu0 %v1354
      %1445 = vmatpush2.msra.mxu0 %v1353
      %1446 = vmatprep.subr.mxu0 %v1352
      %1447 = vmatpush2.msra.mxu0 %v1351
      %1448 = vmatprep.subr.mxu0 %v1350
      %1449 = vmatpush2.msra.mxu0 %v1349
      %1450 = vmatprep.mubr.f32.mxu0 %v1381
      %1451 = vmatmul.mubr.f32.gmra.mxu0 %v1313
      %v1452 = vpop.f32.mrf.mxu0
      %v1453 = vadd.f32 %v1372, %v1452
      %v1454 = vpop.f32.mrf.mxu0
      %v1455 = vadd.f32 %v1372, %v1454
      %1456 = vmatprep.mubr.f32.mxu0 %v1384
      %1457 = vmatmul.mubr.f32.gmra.mxu0 %v1315
      %v1458 = vpop.f32.mrf.mxu0
      %v1459 = vadd.f32 %v1377, %v1458
      %v1460 = vpop.f32.mrf.mxu0
      %v1461 = vadd.f32 %v1377, %v1460
      %1462 = vdwg.mxu0
      %1463 = vst [vmem:[%s332 + $0x10] sm:$0xff] %v1453
      %1464 = vst [vmem:[%s332 + $0x18] sm:$0xff] %v1455
      %1465 = vst [vmem:[%s332 + $0x20] sm:$0xff] %v1459
      %1466 = vst [vmem:[%s332 + $0x28] sm:$0xff] %v1461
      %v1467 = vld [vmem:[%s7] sm:$0xf]
      %v1468 = vld [vmem:[#allocation4] sm:$0xff]
      %v1469 = vld [vmem:[#allocation4 + $0x8] sm:$0xff]
      %v1470 = vld [vmem:[%s8] sm:$0xf]
      %1472 = vset.pattern.permute.xlu0 0
      %1473 = vperm.xlu0 %1472, %v1470
      %v1474 = vpop.permute.xlu0 %1473
      %v1477 = vsel %vm349, %v1467, 0
      %1479 = vmatprep.subr.mxu0 0.0
      %1480 = vmatpush1.msra.mxu0 0.0
      %1481 = vmatprep.subr.mxu0 0.0
      %1482 = vmatpush1.msra.mxu0 0.0
      %1483 = vmatprep.subr.mxu0 0.0
      %1484 = vmatpush1.msra.mxu0 0.0
      %1485 = vmatprep.subr.mxu0 0.0
      %1486 = vmatpush1.msra.mxu0 0.0
      %1487 = vmatprep.subr.mxu0 0.0
      %1488 = vmatpush1.msra.mxu0 0.0
      %1489 = vmatprep.subr.mxu0 0.0
      %1490 = vmatpush1.msra.mxu0 0.0
      %1491 = vmatprep.subr.mxu0 0.0
      %1492 = vmatpush1.msra.mxu0 0.0
      %1493 = vmatprep.subr.mxu0 0.0
      %1494 = vmatpush1.msra.mxu0 0.0
      %1495 = vmatprep.subr.mxu0 0.0
      %1496 = vmatpush1.msra.mxu0 0.0
      %1497 = vmatprep.subr.mxu0 0.0
      %1498 = vmatpush1.msra.mxu0 0.0
      %1499 = vmatprep.subr.mxu0 0.0
      %1500 = vmatpush1.msra.mxu0 0.0
      %1501 = vmatprep.subr.mxu0 0.0
      %1502 = vmatpush1.msra.mxu0 0.0
      %1503 = vmatprep.subr.mxu0 0.0
      %1504 = vmatpush1.msra.mxu0 0.0
      %1505 = vmatprep.subr.mxu0 0.0
      %1506 = vmatpush1.msra.mxu0 0.0
      %1507 = vmatprep.subr.mxu0 0.0
      %1508 = vmatpush1.msra.mxu0 0.0
      %1509 = vmatprep.subr.mxu0 %v1469
      %1510 = vmatpush1.msra.mxu0 %v1468
      %1511 = vmatprep.subr.mxu0 0.0
      %1512 = vmatpush2.msra.mxu0 0.0
      %1513 = vmatprep.subr.mxu0 0.0
      %1514 = vmatpush2.msra.mxu0 0.0
      %1515 = vmatprep.subr.mxu0 0.0
      %1516 = vmatpush2.msra.mxu0 0.0
      %1517 = vmatprep.subr.mxu0 0.0
      %1518 = vmatpush2.msra.mxu0 0.0
      %1519 = vmatprep.subr.mxu0 0.0
      %1520 = vmatpush2.msra.mxu0 0.0
      %1521 = vmatprep.subr.mxu0 0.0
      %1522 = vmatpush2.msra.mxu0 0.0
      %1523 = vmatprep.subr.mxu0 0.0
      %1524 = vmatpush2.msra.mxu0 0.0
      %1525 = vmatprep.subr.mxu0 0.0
      %1526 = vmatpush2.msra.mxu0 0.0
      %1527 = vmatprep.subr.mxu0 0.0
      %1528 = vmatpush2.msra.mxu0 0.0
      %1529 = vmatprep.subr.mxu0 0.0
      %1530 = vmatpush2.msra.mxu0 0.0
      %1531 = vmatprep.subr.mxu0 0.0
      %1532 = vmatpush2.msra.mxu0 0.0
      %1533 = vmatprep.subr.mxu0 0.0
      %1534 = vmatpush2.msra.mxu0 0.0
      %1535 = vmatprep.subr.mxu0 0.0
      %1536 = vmatpush2.msra.mxu0 0.0
      %1537 = vmatprep.subr.mxu0 0.0
      %1538 = vmatpush2.msra.mxu0 0.0
      %1539 = vmatprep.subr.mxu0 0.0
      %1540 = vmatpush2.msra.mxu0 0.0
      %1541 = vmatprep.subr.mxu0 0.0
      %1542 = vmatpush2.msra.mxu0 0.0
      %1543 = vmatprep.mubr.f32.mxu0 0.0
      %1544 = vmatmul.mubr.f32.gmra.mxu0 %v1477
      %v1545 = vpop.f32.mrf.mxu0
      %v1546 = vadd.f32 %v1474, %v1545
      %v1547 = vpop.f32.mrf.mxu0
      %v1548 = vadd.f32 %v1474, %v1547
      %1549 = vdwg.mxu0
      %1550 = vst [vmem:[%s332 + $0x30] sm:$0xf] %v1546
      %1551 = vst [vmem:[%s332 + $0x38] sm:$0xf] %v1548
      %p1552 = scmp.lt.s32.totalorder %s20, 1
      %s1553 = scalar_select %p1552, %s20, 1
      %s1554 = smul.addr %s1553, 8
      %s1555 = smul.addr %s1554, 8
      %s1556 = scalar_lea.vmem %s9, %s1555
      // Predicated region
      $region57: #{inception_forward.1} parent=55 // pred_check
        %p1557 = pneg %p232
      $region58: #{inception_forward.1} parent=55 // pred_check_branch
        %1559 = sbr.rel (%p1557) target = $region60
      $region59: #{inception_forward.1} parent=55 // pred_region
        _
      $region60: #{inception_forward.1} parent=55 // pred_fallthru
        _
    $region56: #{inception_forward.1} parent=5 // pred_fallthru
      _
    %p1560 = scmp.le.s32.totalorder 2, %s15
    // Predicated region
    $region61: #{inception_forward.1} parent=5 // pred_check
      %p1561 = pneg %p1560
    $region62: #{inception_forward.1} parent=5 // pred_check_branch
      %1563 = sbr.rel (%p1561) target = $region64
    $region63: #{inception_forward.1} parent=5 // pred_region
      %s1564 = ssub.s32 %s15, 2
      // Predicated region
      $region65: #{inception_forward.1} parent=63 // pred_check
        %p1565 = pneg %p238
      $region66: #{inception_forward.1} parent=63 // pred_check_branch
        %1567 = sbr.rel (%p1565) target = $region68
      $region67: #{inception_forward.1} parent=63 // pred_region
        %p1568 = scmp.lt.s32.totalorder %s21, 1
        %s1569 = scalar_select %p1568, %s21, 1
        %s1570 = smul.addr %s1569, 8
        %s1571 = smul.addr %s1570, 8
        %s1572 = scalar_lea.vmem %s9, %s1571
      $region68: #{inception_forward.1} parent=63 // pred_fallthru
        _
    $region64: #{inception_forward.1} parent=5 // pred_fallthru
      _
  $region6: #{inception_forward.1} parent=0 // loop_footer
    %s19 = sadd.s32 1, %s15
  $region7: #{inception_forward.1} parent=0 // loop_footer_branch
    %14 = sbr.rel target = $region3
  $region8: #{inception_forward.1} parent=0 // loop_exit
    _

</llo_original>
